<compile_context>
chip_gen: v7x
topology: tpu7x:2x2x1
jax: 0.10.0
libtpu: 0.0.40
codegen_flags: <defaults>
</compile_context>

<pallas_src>
import functools

import jax
import jax.numpy as jnp
from jax.experimental import pallas as pl
from jax.experimental.pallas import tpu as pltpu

_VMEM = functools.partial(pl.BlockSpec, memory_space=pltpu.MemorySpace.VMEM)
_OUT_PAD = 128  # lane-dense output slab width (multiple of 128 lanes)


# ---------------------------------------------------------------------------
# Fused Pallas kernel: embedding -> L GAT layers -> edge gather + MLP readout
# ---------------------------------------------------------------------------
def _gat_net_kernel(src_ref, dst_ref, h0_ref, adj_ref, snorm_ref,
                    emb_w_ref, emb_b_ref, *rest, layer_cfgs):
    f32, bf16 = jnp.float32, jnp.bfloat16
    n_layers = len(layer_cfgs)
    layer_refs = rest[:5 * n_layers]
    (w1a_ref, w1b_ref, b1_ref, w2_ref, b2_ref, w3_ref, b3_ref,
     out_ref, agg_ref) = rest[5 * n_layers:]

    n_nodes = adj_ref.shape[0]
    mask = adj_ref[...] > 0            # adj[dst, src] > 0 — computed once, reused by all layers
    snorm = snorm_ref[...]             # (N, 1)

    # embedding_h  (in_feat_dropout is identity in eval mode)
    h = (jnp.dot(h0_ref[...].astype(bf16), emb_w_ref[...],
                 preferred_element_type=f32) + emb_b_ref[...])

    # ------------------------------ GAT layers ------------------------------
    for li, cfg in enumerate(layer_cfgs):
        w_ref, al_ref, ar_ref, sc_ref, sh_ref = layer_refs[5 * li:5 * li + 5]
        H, D = cfg['num_heads'], cfg['out_dim']
        C = H * D

        feat = jnp.dot(h.astype(bf16), w_ref[...], preferred_element_type=f32)  # (N, C)
        feat_t = feat.T                                                          # (C, N)
        al_t = al_ref[...]     # (D, H)  attn_l, pre-transposed at trace time
        ar = ar_ref[...]       # (H, D)  attn_r

        # Attention logit seeds per head (cheap VPU multiply + reduce, no M=1 matmuls).
        f_heads, s_heads = [], []
        for hd in range(H):
            f = feat[:, hd * D:(hd + 1) * D]                               # (N, D)
            ft = feat_t[hd * D:(hd + 1) * D, :]                            # (D, N)
            er = jnp.sum(f * ar[hd:hd + 1, :], axis=-1, keepdims=True)     # (N, 1) er[dst]
            el = jnp.sum(ft * al_t[:, hd:hd + 1], axis=0, keepdims=True)   # (1, N) el[src]
            f_heads.append(f)
            s_heads.append(er + el)                                        # s[dst, src]
        f_h = jnp.stack(f_heads, 0)                                        # (H, N, D)
        s = jnp.stack(s_heads, 0)                                          # (H, N, N)

        # Heavy N^2 pipeline in ONE pass vectorized over heads.
        s = jnp.where(s > 0, s, 0.2 * s)                                   # LeakyReLU(0.2)
        # Single mask: row max is taken over edges only and non-edge exponentials
        # underflow to exact 0, so no extra "* adj" multiply is needed.
        s = jnp.where(mask[None], s, -1e9)
        p = jnp.exp(s - jnp.max(s, axis=-1, keepdims=True))                # (H, N, N)
        # Row sums are >= 1 (the row max contributes exp(0)=1), so the approximate
        # reciprocal is always safe; degree-0 rows fall back to a uniform average
        # instead of the reference's 0/0 NaN.
        inv_l = pl.reciprocal(jnp.sum(p, axis=-1, keepdims=True), approx=True)

        # Aggregate with unnormalized p, scale rows after the matmul; each head's
        # result goes straight into its lane slice of the VMEM scratch.
        if H == 1:
            out = jnp.dot(p[0].astype(bf16), f_h[0].astype(bf16),
                          preferred_element_type=f32) * inv_l[0]
        else:
            for hd in range(H):
                agg_ref[:, hd * D:(hd + 1) * D] = (
                    jnp.dot(p[hd].astype(bf16), f_h[hd].astype(bf16),
                            preferred_element_type=f32) * inv_l[hd])
            out = agg_ref[:, :C]

        if cfg['graph_norm']:
            out = out * snorm
        if cfg['batch_norm']:
            # BatchNorm1d (eval) folded into a single per-channel scale/shift.
            out = out * sc_ref[...] + sh_ref[...]
        out = jnp.where(out > 0, out, jnp.exp(jnp.minimum(out, 0.0)) - 1.0)  # ELU
        if cfg['residual']:
            out = h + out
        h = out

    # -------------------- apply_edges + MLP readout -------------------------
    # e = MLP(cat([h[src], h[dst]], 1)).  Gather via one-hot matmuls; the first MLP
    # layer is split so the (E, 2C) concat never materializes, and node projections
    # are computed once (N rows) before gathering per edge.
    e_pad = out_ref.shape[0]
    iota = jax.lax.broadcasted_iota(jnp.int32, (e_pad, n_nodes), 1)
    sel_src = (iota == src_ref[...]).astype(bf16)          # (E_pad, N)
    sel_dst = (iota == dst_ref[...]).astype(bf16)
    hb = h.astype(bf16)
    proj_s = jnp.dot(hb, w1a_ref[...], preferred_element_type=f32)   # (N, mid)
    proj_d = jnp.dot(hb, w1b_ref[...], preferred_element_type=f32)
    y = (jnp.dot(sel_src, proj_s.astype(bf16), preferred_element_type=f32)
         + jnp.dot(sel_dst, proj_d.astype(bf16), preferred_element_type=f32)
         + b1_ref[...])
    y = jnp.maximum(y, 0.0)
    y = jnp.dot(y.astype(bf16), w2_ref[...], preferred_element_type=f32) + b2_ref[...]
    y = jnp.maximum(y, 0.0)
    y = jnp.dot(y.astype(bf16), w3_ref[...], preferred_element_type=f32) + b3_ref[...]
    out_ref[...] = y.astype(out_ref.dtype)                 # lane-dense (E_pad, 128) slab


# ---------------------------------------------------------------------------
# Wrappers
# ---------------------------------------------------------------------------
def prepare_params(params):
    """Trace-time parameter prep (done once, outside the kernel):
    fold BN into scale/shift, bf16-cast matmul weights, pre-transpose attn_l,
    split the first readout layer, pad the last one to a lane-dense slab."""
    bf16 = jnp.bfloat16
    layer_args, layer_cfgs = [], []
    for lp in params['layers']:
        scale = lp['bn_gamma'] * jax.lax.rsqrt(lp['bn_var'] + 1e-5)    # (1, C)
        shift = lp['bn_beta'] - lp['bn_mean'] * scale
        layer_args += [lp['w'].astype(bf16),
                       lp['attn_l'].T,          # (D, H)
                       lp['attn_r'],            # (H, D)
                       scale, shift]
        layer_cfgs.append(dict(num_heads=lp['num_heads'], out_dim=lp['out_dim'],
                               graph_norm=lp['graph_norm'],
                               batch_norm=lp['batch_norm'],
                               residual=lp['residual']))
    mp = params['mlp']
    c = mp['w1'].shape[0] // 2
    n_classes = mp['w3'].shape[1]
    w3p = jnp.zeros((mp['w3'].shape[0], _OUT_PAD), jnp.float32).at[:, :n_classes].set(mp['w3'])
    b3p = jnp.zeros((1, _OUT_PAD), jnp.float32).at[:, :n_classes].set(mp['b3'].reshape(1, -1))
    mlp_args = [mp['w1'][:c].astype(bf16), mp['w1'][c:].astype(bf16),
                mp['b1'].reshape(1, -1),
                mp['w2'].astype(bf16), mp['b2'].reshape(1, -1),
                w3p.astype(bf16), b3p]
    return dict(emb_w=params['emb_w'].astype(bf16),
                emb_b=params['emb_b'].reshape(1, -1),
                layer_args=layer_args, layer_cfgs=tuple(layer_cfgs),
                mlp_args=mlp_args, n_classes=n_classes)


def gat_net_forward(prep, h, adj, src, dst, snorm_n):
    """Whole GATNet forward as one fused pallas_call. Returns (E, n_classes)."""
    n = h.shape[0]
    e = int(src.shape[0])
    e_pad = ((e + 7) // 8) * 8                       # round E up to a sublane multiple
    src_p = jnp.zeros((e_pad, 1), jnp.int32).at[:e, 0].set(src.astype(jnp.int32))
    dst_p = jnp.zeros((e_pad, 1), jnp.int32).at[:e, 0].set(dst.astype(jnp.int32))

    layer_cfgs = prep['layer_cfgs']
    c_max = max(c['num_heads'] * c['out_dim'] for c in layer_cfgs)
    args = [src_p, dst_p, h.astype(jnp.float32), adj.astype(jnp.bfloat16),
            snorm_n.astype(jnp.float32), prep['emb_w'], prep['emb_b'],
            *prep['layer_args'], *prep['mlp_args']]

    out = pl.pallas_call(
        functools.partial(_gat_net_kernel, layer_cfgs=layer_cfgs),
        out_shape=jax.ShapeDtypeStruct((e_pad, _OUT_PAD), jnp.float32),
        in_specs=[_VMEM()] * len(args),
        out_specs=_VMEM(),
        scratch_shapes=[pltpu.VMEM((n, c_max), jnp.float32)],
    )(*args)
    # TODO(synk): for very large graphs, tile dst rows with a parallel grid axis
    # and a flash-style streaming softmax instead of the whole-graph VMEM block.
    return out[:e, :prep['n_classes']]


# ---------------------------------------------------------------------------
# Deterministic parameter init (shapes follow GATNet.__init__)
# ---------------------------------------------------------------------------
def _init_linear(key, fan_in, fan_out):
    kw, kb = jax.random.split(key)
    lim = 1.0 / float(fan_in) ** 0.5
    w = jax.random.uniform(kw, (fan_in, fan_out), jnp.float32, -lim, lim)
    b = jax.random.uniform(kb, (fan_out,), jnp.float32, -lim, lim)
    return w, b


def init_gat_net_params(key, net_params):
    in_dim = net_params['in_dim']
    hidden = net_params['hidden_dim']
    out_dim = net_params['out_dim']
    heads = net_params['n_heads']
    n_classes = net_params['n_classes']
    L = net_params['L']
    keys = jax.random.split(key, 4 + L)

    emb_w, emb_b = _init_linear(keys[0], in_dim, hidden * heads)

    layer_cfgs = [(hidden * heads, hidden, heads) for _ in range(L - 1)]
    layer_cfgs.append((hidden * heads, out_dim, 1))
    layers = []
    for i, (di, do, nh) in enumerate(layer_cfgs):
        k1, k2, k3 = jax.random.split(keys[1 + i], 3)
        w, _ = _init_linear(k1, di, do * nh)                      # GATConv.fc (no bias)
        attn_l = jax.random.normal(k2, (nh, do), jnp.float32) * (1.0 / do ** 0.5)
        attn_r = jax.random.normal(k3, (nh, do), jnp.float32) * (1.0 / do ** 0.5)
        c = nh * do
        layers.append(dict(
            w=w, attn_l=attn_l, attn_r=attn_r,
            bn_gamma=jnp.ones((1, c), jnp.float32),
            bn_beta=jnp.zeros((1, c), jnp.float32),
            bn_mean=jnp.zeros((1, c), jnp.float32),
            bn_var=jnp.ones((1, c), jnp.float32),
            num_heads=nh, out_dim=do,
            graph_norm=net_params['graph_norm'],
            batch_norm=net_params['batch_norm'],
            residual=net_params['residual'] and (di == do * nh),
        ))

    # MLPReadout(2*out_dim, n_classes), L=2
    w1, b1 = _init_linear(keys[-3], 2 * out_dim, out_dim)
    w2, b2 = _init_linear(keys[-2], out_dim, out_dim // 2)
    w3, b3 = _init_linear(keys[-1], out_dim // 2, n_classes)
    mlp = dict(w1=w1, b1=b1, w2=w2, b2=b2, w3=w3, b3=b3)

    return dict(emb_w=emb_w, emb_b=emb_b, layers=layers, mlp=mlp)


if __name__ == "__main__":
    net_params = dict(in_dim=4, hidden_dim=8, out_dim=32, n_classes=2, n_heads=4,
                      in_feat_dropout=0.0, dropout=0.0, L=2, readout='mean',
                      graph_norm=True, batch_norm=True, residual=True, device=None)

    key = jax.random.PRNGKey(0)
    kp, kh = jax.random.split(key)
    params = init_gat_net_params(kp, net_params)
    prep = prepare_params(params)

    # Synthetic directed graph: N nodes, edges i -> (i + d) % N for d in {1, 2, 3}.
    N = 16
    src = jnp.array([i for i in range(N) for d in (1, 2, 3)], dtype=jnp.int32)
    dst = jnp.array([(i + d) % N for i in range(N) for d in (1, 2, 3)], dtype=jnp.int32)
    adj = jnp.zeros((N, N), jnp.float32).at[dst, src].set(1.0)    # adj[dst, src]
    snorm_n = jnp.full((N, 1), 1.0 / N ** 0.5, jnp.float32)       # graph-size norm per node
    h = jax.random.normal(kh, (N, net_params['in_dim']), jnp.float32)

    e_out = gat_net_forward(prep, h, adj, src, dst, snorm_n)
    e_out = jax.block_until_ready(e_out)
    assert e_out.shape == (int(src.shape[0]), net_params['n_classes'])
    assert bool(jnp.all(jnp.isfinite(e_out)))
    print("KERNEL_OK")
</pallas_src>

<mosaic_0001>
module attributes {stable_mosaic.version = 11 : i64} {
  func.func @_gat_net_kernel(%arg0: memref<48x1xi32, #tpu.memory_space<vmem>>, %arg1: memref<48x1xi32, #tpu.memory_space<vmem>>, %arg2: memref<16x4xf32, #tpu.memory_space<vmem>>, %arg3: memref<16x16xbf16, #tpu.memory_space<vmem>>, %arg4: memref<16x1xf32, #tpu.memory_space<vmem>>, %arg5: memref<4x32xbf16, #tpu.memory_space<vmem>>, %arg6: memref<1x32xf32, #tpu.memory_space<vmem>>, %arg7: memref<32x32xbf16, #tpu.memory_space<vmem>>, %arg8: memref<8x4xf32, #tpu.memory_space<vmem>>, %arg9: memref<4x8xf32, #tpu.memory_space<vmem>>, %arg10: memref<1x32xf32, #tpu.memory_space<vmem>>, %arg11: memref<1x32xf32, #tpu.memory_space<vmem>>, %arg12: memref<32x32xbf16, #tpu.memory_space<vmem>>, %arg13: memref<32x1xf32, #tpu.memory_space<vmem>>, %arg14: memref<1x32xf32, #tpu.memory_space<vmem>>, %arg15: memref<1x32xf32, #tpu.memory_space<vmem>>, %arg16: memref<1x32xf32, #tpu.memory_space<vmem>>, %arg17: memref<32x32xbf16, #tpu.memory_space<vmem>>, %arg18: memref<32x32xbf16, #tpu.memory_space<vmem>>, %arg19: memref<1x32xf32, #tpu.memory_space<vmem>>, %arg20: memref<32x16xbf16, #tpu.memory_space<vmem>>, %arg21: memref<1x16xf32, #tpu.memory_space<vmem>>, %arg22: memref<16x128xbf16, #tpu.memory_space<vmem>>, %arg23: memref<1x128xf32, #tpu.memory_space<vmem>>, %arg24: memref<48x128xf32, #tpu.memory_space<vmem>>, %arg25: memref<16x32xf32, #tpu.memory_space<vmem>>) attributes {dimension_semantics = [], scalar_prefetch = 0 : i64, scratch_operands = 1 : i64, tpu.core_type = #tpu.core_type<tc>} {
    %c0 = arith.constant 0 : index
    %c0_0 = arith.constant 0 : index
    %0 = vector.load %arg3[%c0, %c0_0] : memref<16x16xbf16, #tpu.memory_space<vmem>>, vector<16x16xbf16>
    %cst = arith.constant 0.000000e+00 : bf16
    %1 = vector.broadcast %cst : bf16 to vector<16x16xbf16>
    %2 = arith.cmpf ogt, %0, %1 : vector<16x16xbf16>
    %c0_1 = arith.constant 0 : index
    %c0_2 = arith.constant 0 : index
    %3 = vector.load %arg4[%c0_1, %c0_2] : memref<16x1xf32, #tpu.memory_space<vmem>>, vector<16x1xf32>
    %c0_3 = arith.constant 0 : index
    %c0_4 = arith.constant 0 : index
    %4 = vector.load %arg2[%c0_3, %c0_4] : memref<16x4xf32, #tpu.memory_space<vmem>>, vector<16x4xf32>
    %5 = arith.truncf %4 : vector<16x4xf32> to vector<16x4xbf16>
    %c0_5 = arith.constant 0 : index
    %c0_6 = arith.constant 0 : index
    %6 = vector.load %arg5[%c0_5, %c0_6] : memref<4x32xbf16, #tpu.memory_space<vmem>>, vector<4x32xbf16>
    %cst_7 = arith.constant dense<0.000000e+00> : vector<16x32xf32>
    %7 = tpu.matmul %5, %6, %cst_7 {dimension_numbers = #tpu.dot_dimension_numbers<[1], [0], [0], [1], [0, 0, 1, 1], [], []>} : vector<16x4xbf16>, vector<4x32xbf16>, vector<16x32xf32> -> vector<16x32xf32>
    %c0_8 = arith.constant 0 : index
    %c0_9 = arith.constant 0 : index
    %8 = vector.load %arg6[%c0_8, %c0_9] : memref<1x32xf32, #tpu.memory_space<vmem>>, vector<1x32xf32>
    %9 = vector.broadcast %8 : vector<1x32xf32> to vector<16x32xf32>
    %10 = arith.addf %7, %9 : vector<16x32xf32>
    %11 = arith.truncf %10 : vector<16x32xf32> to vector<16x32xbf16>
    %c0_10 = arith.constant 0 : index
    %c0_11 = arith.constant 0 : index
    %12 = vector.load %arg7[%c0_10, %c0_11] : memref<32x32xbf16, #tpu.memory_space<vmem>>, vector<32x32xbf16>
    %cst_12 = arith.constant dense<0.000000e+00> : vector<16x32xf32>
    %13 = tpu.matmul %11, %12, %cst_12 {dimension_numbers = #tpu.dot_dimension_numbers<[1], [0], [0], [1], [0, 0, 1, 1], [], []>} : vector<16x32xbf16>, vector<32x32xbf16>, vector<16x32xf32> -> vector<16x32xf32>
    %14 = tpu.transpose %13, [1, 0] : vector<16x32xf32> -> vector<32x16xf32>
    %c0_13 = arith.constant 0 : index
    %c0_14 = arith.constant 0 : index
    %15 = vector.load %arg8[%c0_13, %c0_14] : memref<8x4xf32, #tpu.memory_space<vmem>>, vector<8x4xf32>
    %c0_15 = arith.constant 0 : index
    %c0_16 = arith.constant 0 : index
    %16 = vector.load %arg9[%c0_15, %c0_16] : memref<4x8xf32, #tpu.memory_space<vmem>>, vector<4x8xf32>
    %17 = vector.extract_strided_slice %13 {offsets = [0, 0], sizes = [16, 8], strides = [1, 1]} : vector<16x32xf32> to vector<16x8xf32>
    %18 = vector.extract_strided_slice %14 {offsets = [0, 0], sizes = [8, 16], strides = [1, 1]} : vector<32x16xf32> to vector<8x16xf32>
    %19 = vector.extract_strided_slice %16 {offsets = [0, 0], sizes = [1, 8], strides = [1, 1]} : vector<4x8xf32> to vector<1x8xf32>
    %20 = vector.broadcast %19 : vector<1x8xf32> to vector<16x8xf32>
    %21 = arith.mulf %17, %20 : vector<16x8xf32>
    %cst_17 = arith.constant dense<0.000000e+00> : vector<16xf32>
    %22 = vector.multi_reduction <add>, %21, %cst_17 [1] : vector<16x8xf32> to vector<16xf32>
    %23 = vector.shape_cast %22 : vector<16xf32> to vector<16x1xf32>
    %24 = vector.extract_strided_slice %15 {offsets = [0, 0], sizes = [8, 1], strides = [1, 1]} : vector<8x4xf32> to vector<8x1xf32>
    %25 = vector.broadcast %24 : vector<8x1xf32> to vector<8x16xf32>
    %26 = arith.mulf %18, %25 : vector<8x16xf32>
    %cst_18 = arith.constant dense<0.000000e+00> : vector<16xf32>
    %27 = vector.multi_reduction <add>, %26, %cst_18 [0] : vector<8x16xf32> to vector<16xf32>
    %28 = vector.shape_cast %27 : vector<16xf32> to vector<1x16xf32>
    %29 = vector.broadcast %23 : vector<16x1xf32> to vector<16x16xf32>
    %30 = vector.broadcast %28 : vector<1x16xf32> to vector<16x16xf32>
    %31 = arith.addf %29, %30 : vector<16x16xf32>
    %32 = vector.extract_strided_slice %13 {offsets = [0, 8], sizes = [16, 8], strides = [1, 1]} : vector<16x32xf32> to vector<16x8xf32>
    %33 = vector.extract_strided_slice %14 {offsets = [8, 0], sizes = [8, 16], strides = [1, 1]} : vector<32x16xf32> to vector<8x16xf32>
    %34 = vector.extract_strided_slice %16 {offsets = [1, 0], sizes = [1, 8], strides = [1, 1]} : vector<4x8xf32> to vector<1x8xf32>
    %35 = vector.broadcast %34 : vector<1x8xf32> to vector<16x8xf32>
    %36 = arith.mulf %32, %35 : vector<16x8xf32>
    %cst_19 = arith.constant dense<0.000000e+00> : vector<16xf32>
    %37 = vector.multi_reduction <add>, %36, %cst_19 [1] : vector<16x8xf32> to vector<16xf32>
    %38 = vector.shape_cast %37 : vector<16xf32> to vector<16x1xf32>
    %39 = vector.extract_strided_slice %15 {offsets = [0, 1], sizes = [8, 1], strides = [1, 1]} : vector<8x4xf32> to vector<8x1xf32>
    %40 = vector.broadcast %39 : vector<8x1xf32> to vector<8x16xf32>
    %41 = arith.mulf %33, %40 : vector<8x16xf32>
    %cst_20 = arith.constant dense<0.000000e+00> : vector<16xf32>
    %42 = vector.multi_reduction <add>, %41, %cst_20 [0] : vector<8x16xf32> to vector<16xf32>
    %43 = vector.shape_cast %42 : vector<16xf32> to vector<1x16xf32>
    %44 = vector.broadcast %38 : vector<16x1xf32> to vector<16x16xf32>
    %45 = vector.broadcast %43 : vector<1x16xf32> to vector<16x16xf32>
    %46 = arith.addf %44, %45 : vector<16x16xf32>
    %47 = vector.extract_strided_slice %13 {offsets = [0, 16], sizes = [16, 8], strides = [1, 1]} : vector<16x32xf32> to vector<16x8xf32>
    %48 = vector.extract_strided_slice %14 {offsets = [16, 0], sizes = [8, 16], strides = [1, 1]} : vector<32x16xf32> to vector<8x16xf32>
    %49 = vector.extract_strided_slice %16 {offsets = [2, 0], sizes = [1, 8], strides = [1, 1]} : vector<4x8xf32> to vector<1x8xf32>
    %50 = vector.broadcast %49 : vector<1x8xf32> to vector<16x8xf32>
    %51 = arith.mulf %47, %50 : vector<16x8xf32>
    %cst_21 = arith.constant dense<0.000000e+00> : vector<16xf32>
    %52 = vector.multi_reduction <add>, %51, %cst_21 [1] : vector<16x8xf32> to vector<16xf32>
    %53 = vector.shape_cast %52 : vector<16xf32> to vector<16x1xf32>
    %54 = vector.extract_strided_slice %15 {offsets = [0, 2], sizes = [8, 1], strides = [1, 1]} : vector<8x4xf32> to vector<8x1xf32>
    %55 = vector.broadcast %54 : vector<8x1xf32> to vector<8x16xf32>
    %56 = arith.mulf %48, %55 : vector<8x16xf32>
    %cst_22 = arith.constant dense<0.000000e+00> : vector<16xf32>
    %57 = vector.multi_reduction <add>, %56, %cst_22 [0] : vector<8x16xf32> to vector<16xf32>
    %58 = vector.shape_cast %57 : vector<16xf32> to vector<1x16xf32>
    %59 = vector.broadcast %53 : vector<16x1xf32> to vector<16x16xf32>
    %60 = vector.broadcast %58 : vector<1x16xf32> to vector<16x16xf32>
    %61 = arith.addf %59, %60 : vector<16x16xf32>
    %62 = vector.extract_strided_slice %13 {offsets = [0, 24], sizes = [16, 8], strides = [1, 1]} : vector<16x32xf32> to vector<16x8xf32>
    %63 = vector.extract_strided_slice %14 {offsets = [24, 0], sizes = [8, 16], strides = [1, 1]} : vector<32x16xf32> to vector<8x16xf32>
    %64 = vector.extract_strided_slice %16 {offsets = [3, 0], sizes = [1, 8], strides = [1, 1]} : vector<4x8xf32> to vector<1x8xf32>
    %65 = vector.broadcast %64 : vector<1x8xf32> to vector<16x8xf32>
    %66 = arith.mulf %62, %65 : vector<16x8xf32>
    %cst_23 = arith.constant dense<0.000000e+00> : vector<16xf32>
    %67 = vector.multi_reduction <add>, %66, %cst_23 [1] : vector<16x8xf32> to vector<16xf32>
    %68 = vector.shape_cast %67 : vector<16xf32> to vector<16x1xf32>
    %69 = vector.extract_strided_slice %15 {offsets = [0, 3], sizes = [8, 1], strides = [1, 1]} : vector<8x4xf32> to vector<8x1xf32>
    %70 = vector.broadcast %69 : vector<8x1xf32> to vector<8x16xf32>
    %71 = arith.mulf %63, %70 : vector<8x16xf32>
    %cst_24 = arith.constant dense<0.000000e+00> : vector<16xf32>
    %72 = vector.multi_reduction <add>, %71, %cst_24 [0] : vector<8x16xf32> to vector<16xf32>
    %73 = vector.shape_cast %72 : vector<16xf32> to vector<1x16xf32>
    %74 = vector.broadcast %68 : vector<16x1xf32> to vector<16x16xf32>
    %75 = vector.broadcast %73 : vector<1x16xf32> to vector<16x16xf32>
    %76 = arith.addf %74, %75 : vector<16x16xf32>
    %77 = vector.shape_cast %17 : vector<16x8xf32> to vector<1x16x8xf32>
    %78 = vector.shape_cast %32 : vector<16x8xf32> to vector<1x16x8xf32>
    %79 = vector.shape_cast %47 : vector<16x8xf32> to vector<1x16x8xf32>
    %80 = vector.shape_cast %62 : vector<16x8xf32> to vector<1x16x8xf32>
    %81 = tpu.concatenate %77, %78, %79, %80 in 0 : vector<1x16x8xf32>, vector<1x16x8xf32>, vector<1x16x8xf32>, vector<1x16x8xf32> -> vector<4x16x8xf32>
    %82 = vector.shape_cast %31 : vector<16x16xf32> to vector<1x16x16xf32>
    %83 = vector.shape_cast %46 : vector<16x16xf32> to vector<1x16x16xf32>
    %84 = vector.shape_cast %61 : vector<16x16xf32> to vector<1x16x16xf32>
    %85 = vector.shape_cast %76 : vector<16x16xf32> to vector<1x16x16xf32>
    %86 = tpu.concatenate %82, %83, %84, %85 in 0 : vector<1x16x16xf32>, vector<1x16x16xf32>, vector<1x16x16xf32>, vector<1x16x16xf32> -> vector<4x16x16xf32>
    %cst_25 = arith.constant 0.000000e+00 : f32
    %87 = vector.broadcast %cst_25 : f32 to vector<4x16x16xf32>
    %88 = arith.cmpf ogt, %86, %87 : vector<4x16x16xf32>
    %cst_26 = arith.constant 2.000000e-01 : f32
    %89 = vector.broadcast %cst_26 : f32 to vector<4x16x16xf32>
    %90 = arith.mulf %89, %86 : vector<4x16x16xf32>
    %91 = arith.select %88, %86, %90 : vector<4x16x16xi1>, vector<4x16x16xf32>
    %92 = vector.shape_cast %2 : vector<16x16xi1> to vector<1x16x16xi1>
    %cst_27 = arith.constant -1.000000e+09 : f32
    %93 = vector.shape_cast %92 : vector<1x16x16xi1> to vector<1x16x16xi1>
    %94 = vector.broadcast %93 : vector<1x16x16xi1> to vector<4x16x16xi1>
    %95 = vector.broadcast %cst_27 : f32 to vector<4x16x16xf32>
    %96 = arith.select %94, %91, %95 : vector<4x16x16xi1>, vector<4x16x16xf32>
    %cst_28 = arith.constant dense<0xFF800000> : vector<4x16xf32>
    %97 = vector.multi_reduction <maximumf>, %96, %cst_28 [2] : vector<4x16x16xf32> to vector<4x16xf32>
    %98 = vector.shape_cast %97 : vector<4x16xf32> to vector<4x16x1xf32>
    %99 = vector.broadcast %98 : vector<4x16x1xf32> to vector<4x16x16xf32>
    %100 = arith.subf %96, %99 : vector<4x16x16xf32>
    %101 = math.exp %100 : vector<4x16x16xf32>
    %cst_29 = arith.constant dense<0.000000e+00> : vector<4x16xf32>
    %102 = vector.multi_reduction <add>, %101, %cst_29 [2] : vector<4x16x16xf32> to vector<4x16xf32>
    %103 = vector.shape_cast %102 : vector<4x16xf32> to vector<4x16x1xf32>
    %104 = tpu.reciprocal %103 {approx = true} : vector<4x16x1xf32> -> vector<4x16x1xf32>
    %105 = vector.extract_strided_slice %101 {offsets = [0, 0, 0], sizes = [1, 16, 16], strides = [1, 1, 1]} : vector<4x16x16xf32> to vector<1x16x16xf32>
    %106 = vector.shape_cast %105 : vector<1x16x16xf32> to vector<16x16xf32>
    %107 = arith.truncf %106 : vector<16x16xf32> to vector<16x16xbf16>
    %108 = vector.extract_strided_slice %81 {offsets = [0, 0, 0], sizes = [1, 16, 8], strides = [1, 1, 1]} : vector<4x16x8xf32> to vector<1x16x8xf32>
    %109 = vector.shape_cast %108 : vector<1x16x8xf32> to vector<16x8xf32>
    %110 = arith.truncf %109 : vector<16x8xf32> to vector<16x8xbf16>
    %cst_30 = arith.constant dense<0.000000e+00> : vector<16x8xf32>
    %111 = tpu.matmul %107, %110, %cst_30 {dimension_numbers = #tpu.dot_dimension_numbers<[1], [0], [0], [1], [0, 0, 1, 1], [], []>} : vector<16x16xbf16>, vector<16x8xbf16>, vector<16x8xf32> -> vector<16x8xf32>
    %112 = vector.extract_strided_slice %104 {offsets = [0, 0, 0], sizes = [1, 16, 1], strides = [1, 1, 1]} : vector<4x16x1xf32> to vector<1x16x1xf32>
    %113 = vector.shape_cast %112 : vector<1x16x1xf32> to vector<16x1xf32>
    %114 = vector.broadcast %113 : vector<16x1xf32> to vector<16x8xf32>
    %115 = arith.mulf %111, %114 : vector<16x8xf32>
    %c0_31 = arith.constant 0 : index
    %c0_32 = arith.constant 0 : index
    %116 = vector.load %arg25[%c0_31, %c0_32] : memref<16x32xf32, #tpu.memory_space<vmem>>, vector<16x8xf32>
    tpu.vector_store %arg25[%c0_31, %c0_32], %115 {strides = array<i32>} : memref<16x32xf32, #tpu.memory_space<vmem>>, vector<16x8xf32>,
    %117 = vector.extract_strided_slice %101 {offsets = [1, 0, 0], sizes = [1, 16, 16], strides = [1, 1, 1]} : vector<4x16x16xf32> to vector<1x16x16xf32>
    %118 = vector.shape_cast %117 : vector<1x16x16xf32> to vector<16x16xf32>
    %119 = arith.truncf %118 : vector<16x16xf32> to vector<16x16xbf16>
    %120 = vector.extract_strided_slice %81 {offsets = [1, 0, 0], sizes = [1, 16, 8], strides = [1, 1, 1]} : vector<4x16x8xf32> to vector<1x16x8xf32>
    %121 = vector.shape_cast %120 : vector<1x16x8xf32> to vector<16x8xf32>
    %122 = arith.truncf %121 : vector<16x8xf32> to vector<16x8xbf16>
    %cst_33 = arith.constant dense<0.000000e+00> : vector<16x8xf32>
    %123 = tpu.matmul %119, %122, %cst_33 {dimension_numbers = #tpu.dot_dimension_numbers<[1], [0], [0], [1], [0, 0, 1, 1], [], []>} : vector<16x16xbf16>, vector<16x8xbf16>, vector<16x8xf32> -> vector<16x8xf32>
    %124 = vector.extract_strided_slice %104 {offsets = [1, 0, 0], sizes = [1, 16, 1], strides = [1, 1, 1]} : vector<4x16x1xf32> to vector<1x16x1xf32>
    %125 = vector.shape_cast %124 : vector<1x16x1xf32> to vector<16x1xf32>
    %126 = vector.broadcast %125 : vector<16x1xf32> to vector<16x8xf32>
    %127 = arith.mulf %123, %126 : vector<16x8xf32>
    %c0_34 = arith.constant 0 : index
    %c8 = arith.constant 8 : index
    %128 = vector.load %arg25[%c0_34, %c8] : memref<16x32xf32, #tpu.memory_space<vmem>>, vector<16x8xf32>
    tpu.vector_store %arg25[%c0_34, %c8], %127 {strides = array<i32>} : memref<16x32xf32, #tpu.memory_space<vmem>>, vector<16x8xf32>,
    %129 = vector.extract_strided_slice %101 {offsets = [2, 0, 0], sizes = [1, 16, 16], strides = [1, 1, 1]} : vector<4x16x16xf32> to vector<1x16x16xf32>
    %130 = vector.shape_cast %129 : vector<1x16x16xf32> to vector<16x16xf32>
    %131 = arith.truncf %130 : vector<16x16xf32> to vector<16x16xbf16>
    %132 = vector.extract_strided_slice %81 {offsets = [2, 0, 0], sizes = [1, 16, 8], strides = [1, 1, 1]} : vector<4x16x8xf32> to vector<1x16x8xf32>
    %133 = vector.shape_cast %132 : vector<1x16x8xf32> to vector<16x8xf32>
    %134 = arith.truncf %133 : vector<16x8xf32> to vector<16x8xbf16>
    %cst_35 = arith.constant dense<0.000000e+00> : vector<16x8xf32>
    %135 = tpu.matmul %131, %134, %cst_35 {dimension_numbers = #tpu.dot_dimension_numbers<[1], [0], [0], [1], [0, 0, 1, 1], [], []>} : vector<16x16xbf16>, vector<16x8xbf16>, vector<16x8xf32> -> vector<16x8xf32>
    %136 = vector.extract_strided_slice %104 {offsets = [2, 0, 0], sizes = [1, 16, 1], strides = [1, 1, 1]} : vector<4x16x1xf32> to vector<1x16x1xf32>
    %137 = vector.shape_cast %136 : vector<1x16x1xf32> to vector<16x1xf32>
    %138 = vector.broadcast %137 : vector<16x1xf32> to vector<16x8xf32>
    %139 = arith.mulf %135, %138 : vector<16x8xf32>
    %c0_36 = arith.constant 0 : index
    %c16 = arith.constant 16 : index
    %140 = vector.load %arg25[%c0_36, %c16] : memref<16x32xf32, #tpu.memory_space<vmem>>, vector<16x8xf32>
    tpu.vector_store %arg25[%c0_36, %c16], %139 {strides = array<i32>} : memref<16x32xf32, #tpu.memory_space<vmem>>, vector<16x8xf32>,
    %141 = vector.extract_strided_slice %101 {offsets = [3, 0, 0], sizes = [1, 16, 16], strides = [1, 1, 1]} : vector<4x16x16xf32> to vector<1x16x16xf32>
    %142 = vector.shape_cast %141 : vector<1x16x16xf32> to vector<16x16xf32>
    %143 = arith.truncf %142 : vector<16x16xf32> to vector<16x16xbf16>
    %144 = vector.extract_strided_slice %81 {offsets = [3, 0, 0], sizes = [1, 16, 8], strides = [1, 1, 1]} : vector<4x16x8xf32> to vector<1x16x8xf32>
    %145 = vector.shape_cast %144 : vector<1x16x8xf32> to vector<16x8xf32>
    %146 = arith.truncf %145 : vector<16x8xf32> to vector<16x8xbf16>
    %cst_37 = arith.constant dense<0.000000e+00> : vector<16x8xf32>
    %147 = tpu.matmul %143, %146, %cst_37 {dimension_numbers = #tpu.dot_dimension_numbers<[1], [0], [0], [1], [0, 0, 1, 1], [], []>} : vector<16x16xbf16>, vector<16x8xbf16>, vector<16x8xf32> -> vector<16x8xf32>
    %148 = vector.extract_strided_slice %104 {offsets = [3, 0, 0], sizes = [1, 16, 1], strides = [1, 1, 1]} : vector<4x16x1xf32> to vector<1x16x1xf32>
    %149 = vector.shape_cast %148 : vector<1x16x1xf32> to vector<16x1xf32>
    %150 = vector.broadcast %149 : vector<16x1xf32> to vector<16x8xf32>
    %151 = arith.mulf %147, %150 : vector<16x8xf32>
    %c0_38 = arith.constant 0 : index
    %c24 = arith.constant 24 : index
    %152 = vector.load %arg25[%c0_38, %c24] : memref<16x32xf32, #tpu.memory_space<vmem>>, vector<16x8xf32>
    tpu.vector_store %arg25[%c0_38, %c24], %151 {strides = array<i32>} : memref<16x32xf32, #tpu.memory_space<vmem>>, vector<16x8xf32>,
    %c0_39 = arith.constant 0 : index
    %c0_40 = arith.constant 0 : index
    %153 = vector.load %arg25[%c0_39, %c0_40] : memref<16x32xf32, #tpu.memory_space<vmem>>, vector<16x32xf32>
    %154 = vector.broadcast %3 : vector<16x1xf32> to vector<16x32xf32>
    %155 = arith.mulf %153, %154 : vector<16x32xf32>
    %c0_41 = arith.constant 0 : index
    %c0_42 = arith.constant 0 : index
    %156 = vector.load %arg10[%c0_41, %c0_42] : memref<1x32xf32, #tpu.memory_space<vmem>>, vector<1x32xf32>
    %157 = vector.broadcast %156 : vector<1x32xf32> to vector<16x32xf32>
    %158 = arith.mulf %155, %157 : vector<16x32xf32>
    %c0_43 = arith.constant 0 : index
    %c0_44 = arith.constant 0 : index
    %159 = vector.load %arg11[%c0_43, %c0_44] : memref<1x32xf32, #tpu.memory_space<vmem>>, vector<1x32xf32>
    %160 = vector.broadcast %159 : vector<1x32xf32> to vector<16x32xf32>
    %161 = arith.addf %158, %160 : vector<16x32xf32>
    %cst_45 = arith.constant 0.000000e+00 : f32
    %162 = vector.broadcast %cst_45 : f32 to vector<16x32xf32>
    %163 = arith.cmpf ogt, %161, %162 : vector<16x32xf32>
    %cst_46 = arith.constant 0.000000e+00 : f32
    %164 = vector.broadcast %cst_46 : f32 to vector<16x32xf32>
    %165 = arith.minimumf %161, %164 : vector<16x32xf32>
    %166 = math.exp %165 : vector<16x32xf32>
    %cst_47 = arith.constant 1.000000e+00 : f32
    %167 = vector.broadcast %cst_47 : f32 to vector<16x32xf32>
    %168 = arith.subf %166, %167 : vector<16x32xf32>
    %169 = arith.select %163, %161, %168 : vector<16x32xi1>, vector<16x32xf32>
    %170 = arith.addf %10, %169 : vector<16x32xf32>
    %171 = arith.truncf %170 : vector<16x32xf32> to vector<16x32xbf16>
    %c0_48 = arith.constant 0 : index
    %c0_49 = arith.constant 0 : index
    %172 = vector.load %arg12[%c0_48, %c0_49] : memref<32x32xbf16, #tpu.memory_space<vmem>>, vector<32x32xbf16>
    %cst_50 = arith.constant dense<0.000000e+00> : vector<16x32xf32>
    %173 = tpu.matmul %171, %172, %cst_50 {dimension_numbers = #tpu.dot_dimension_numbers<[1], [0], [0], [1], [0, 0, 1, 1], [], []>} : vector<16x32xbf16>, vector<32x32xbf16>, vector<16x32xf32> -> vector<16x32xf32>
    %174 = tpu.transpose %173, [1, 0] : vector<16x32xf32> -> vector<32x16xf32>
    %c0_51 = arith.constant 0 : index
    %c0_52 = arith.constant 0 : index
    %175 = vector.load %arg13[%c0_51, %c0_52] : memref<32x1xf32, #tpu.memory_space<vmem>>, vector<32x1xf32>
    %c0_53 = arith.constant 0 : index
    %c0_54 = arith.constant 0 : index
    %176 = vector.load %arg14[%c0_53, %c0_54] : memref<1x32xf32, #tpu.memory_space<vmem>>, vector<1x32xf32>
    %177 = vector.broadcast %176 : vector<1x32xf32> to vector<16x32xf32>
    %178 = arith.mulf %173, %177 : vector<16x32xf32>
    %cst_55 = arith.constant dense<0.000000e+00> : vector<16xf32>
    %179 = vector.multi_reduction <add>, %178, %cst_55 [1] : vector<16x32xf32> to vector<16xf32>
    %180 = vector.shape_cast %179 : vector<16xf32> to vector<16x1xf32>
    %181 = vector.broadcast %175 : vector<32x1xf32> to vector<32x16xf32>
    %182 = arith.mulf %174, %181 : vector<32x16xf32>
    %cst_56 = arith.constant dense<0.000000e+00> : vector<16xf32>
    %183 = vector.multi_reduction <add>, %182, %cst_56 [0] : vector<32x16xf32> to vector<16xf32>
    %184 = vector.shape_cast %183 : vector<16xf32> to vector<1x16xf32>
    %185 = vector.broadcast %180 : vector<16x1xf32> to vector<16x16xf32>
    %186 = vector.broadcast %184 : vector<1x16xf32> to vector<16x16xf32>
    %187 = arith.addf %185, %186 : vector<16x16xf32>
    %188 = vector.shape_cast %173 : vector<16x32xf32> to vector<1x16x32xf32>
    %189 = vector.shape_cast %187 : vector<16x16xf32> to vector<1x16x16xf32>
    %cst_57 = arith.constant 0.000000e+00 : f32
    %190 = vector.broadcast %cst_57 : f32 to vector<1x16x16xf32>
    %191 = arith.cmpf ogt, %189, %190 : vector<1x16x16xf32>
    %cst_58 = arith.constant 2.000000e-01 : f32
    %192 = vector.broadcast %cst_58 : f32 to vector<1x16x16xf32>
    %193 = arith.mulf %192, %189 : vector<1x16x16xf32>
    %194 = arith.select %191, %189, %193 : vector<1x16x16xi1>, vector<1x16x16xf32>
    %195 = vector.shape_cast %2 : vector<16x16xi1> to vector<1x16x16xi1>
    %cst_59 = arith.constant -1.000000e+09 : f32
    %196 = vector.broadcast %cst_59 : f32 to vector<1x16x16xf32>
    %197 = arith.select %195, %194, %196 : vector<1x16x16xi1>, vector<1x16x16xf32>
    %cst_60 = arith.constant dense<0xFF800000> : vector<1x16xf32>
    %198 = vector.multi_reduction <maximumf>, %197, %cst_60 [2] : vector<1x16x16xf32> to vector<1x16xf32>
    %199 = vector.shape_cast %198 : vector<1x16xf32> to vector<1x16x1xf32>
    %200 = vector.broadcast %199 : vector<1x16x1xf32> to vector<1x16x16xf32>
    %201 = arith.subf %197, %200 : vector<1x16x16xf32>
    %202 = math.exp %201 : vector<1x16x16xf32>
    %cst_61 = arith.constant dense<0.000000e+00> : vector<1x16xf32>
    %203 = vector.multi_reduction <add>, %202, %cst_61 [2] : vector<1x16x16xf32> to vector<1x16xf32>
    %204 = vector.shape_cast %203 : vector<1x16xf32> to vector<1x16x1xf32>
    %205 = tpu.reciprocal %204 {approx = true} : vector<1x16x1xf32> -> vector<1x16x1xf32>
    %206 = vector.shape_cast %202 : vector<1x16x16xf32> to vector<16x16xf32>
    %207 = arith.truncf %206 : vector<16x16xf32> to vector<16x16xbf16>
    %208 = vector.shape_cast %188 : vector<1x16x32xf32> to vector<16x32xf32>
    %209 = arith.truncf %208 : vector<16x32xf32> to vector<16x32xbf16>
    %cst_62 = arith.constant dense<0.000000e+00> : vector<16x32xf32>
    %210 = tpu.matmul %207, %209, %cst_62 {dimension_numbers = #tpu.dot_dimension_numbers<[1], [0], [0], [1], [0, 0, 1, 1], [], []>} : vector<16x16xbf16>, vector<16x32xbf16>, vector<16x32xf32> -> vector<16x32xf32>
    %211 = vector.shape_cast %205 : vector<1x16x1xf32> to vector<16x1xf32>
    %212 = vector.broadcast %211 : vector<16x1xf32> to vector<16x32xf32>
    %213 = arith.mulf %210, %212 : vector<16x32xf32>
    %214 = vector.broadcast %3 : vector<16x1xf32> to vector<16x32xf32>
    %215 = arith.mulf %213, %214 : vector<16x32xf32>
    %c0_63 = arith.constant 0 : index
    %c0_64 = arith.constant 0 : index
    %216 = vector.load %arg15[%c0_63, %c0_64] : memref<1x32xf32, #tpu.memory_space<vmem>>, vector<1x32xf32>
    %217 = vector.broadcast %216 : vector<1x32xf32> to vector<16x32xf32>
    %218 = arith.mulf %215, %217 : vector<16x32xf32>
    %c0_65 = arith.constant 0 : index
    %c0_66 = arith.constant 0 : index
    %219 = vector.load %arg16[%c0_65, %c0_66] : memref<1x32xf32, #tpu.memory_space<vmem>>, vector<1x32xf32>
    %220 = vector.broadcast %219 : vector<1x32xf32> to vector<16x32xf32>
    %221 = arith.addf %218, %220 : vector<16x32xf32>
    %cst_67 = arith.constant 0.000000e+00 : f32
    %222 = vector.broadcast %cst_67 : f32 to vector<16x32xf32>
    %223 = arith.cmpf ogt, %221, %222 : vector<16x32xf32>
    %cst_68 = arith.constant 0.000000e+00 : f32
    %224 = vector.broadcast %cst_68 : f32 to vector<16x32xf32>
    %225 = arith.minimumf %221, %224 : vector<16x32xf32>
    %226 = math.exp %225 : vector<16x32xf32>
    %cst_69 = arith.constant 1.000000e+00 : f32
    %227 = vector.broadcast %cst_69 : f32 to vector<16x32xf32>
    %228 = arith.subf %226, %227 : vector<16x32xf32>
    %229 = arith.select %223, %221, %228 : vector<16x32xi1>, vector<16x32xf32>
    %230 = arith.addf %170, %229 : vector<16x32xf32>
    %231 = tpu.iota {dimensions = array<i32: 1>} : vector<48x16xi32>
    %c0_70 = arith.constant 0 : index
    %c0_71 = arith.constant 0 : index
    %232 = vector.load %arg0[%c0_70, %c0_71] : memref<48x1xi32, #tpu.memory_space<vmem>>, vector<48x1xi32>
    %233 = vector.broadcast %232 : vector<48x1xi32> to vector<48x16xi32>
    %234 = arith.cmpi eq, %231, %233 : vector<48x16xi32>
    %235 = arith.extui %234 : vector<48x16xi1> to vector<48x16xi32>
    %236 = arith.sitofp %235 : vector<48x16xi32> to vector<48x16xf32>
    %237 = arith.truncf %236 : vector<48x16xf32> to vector<48x16xbf16>
    %c0_72 = arith.constant 0 : index
    %c0_73 = arith.constant 0 : index
    %238 = vector.load %arg1[%c0_72, %c0_73] : memref<48x1xi32, #tpu.memory_space<vmem>>, vector<48x1xi32>
    %239 = vector.broadcast %238 : vector<48x1xi32> to vector<48x16xi32>
    %240 = arith.cmpi eq, %231, %239 : vector<48x16xi32>
    %241 = arith.extui %240 : vector<48x16xi1> to vector<48x16xi32>
    %242 = arith.sitofp %241 : vector<48x16xi32> to vector<48x16xf32>
    %243 = arith.truncf %242 : vector<48x16xf32> to vector<48x16xbf16>
    %244 = arith.truncf %230 : vector<16x32xf32> to vector<16x32xbf16>
    %c0_74 = arith.constant 0 : index
    %c0_75 = arith.constant 0 : index
    %245 = vector.load %arg17[%c0_74, %c0_75] : memref<32x32xbf16, #tpu.memory_space<vmem>>, vector<32x32xbf16>
    %cst_76 = arith.constant dense<0.000000e+00> : vector<16x32xf32>
    %246 = tpu.matmul %244, %245, %cst_76 {dimension_numbers = #tpu.dot_dimension_numbers<[1], [0], [0], [1], [0, 0, 1, 1], [], []>} : vector<16x32xbf16>, vector<32x32xbf16>, vector<16x32xf32> -> vector<16x32xf32>
    %c0_77 = arith.constant 0 : index
    %c0_78 = arith.constant 0 : index
    %247 = vector.load %arg18[%c0_77, %c0_78] : memref<32x32xbf16, #tpu.memory_space<vmem>>, vector<32x32xbf16>
    %cst_79 = arith.constant dense<0.000000e+00> : vector<16x32xf32>
    %248 = tpu.matmul %244, %247, %cst_79 {dimension_numbers = #tpu.dot_dimension_numbers<[1], [0], [0], [1], [0, 0, 1, 1], [], []>} : vector<16x32xbf16>, vector<32x32xbf16>, vector<16x32xf32> -> vector<16x32xf32>
    %249 = arith.truncf %246 : vector<16x32xf32> to vector<16x32xbf16>
    %cst_80 = arith.constant dense<0.000000e+00> : vector<48x32xf32>
    %250 = tpu.matmul %237, %249, %cst_80 {dimension_numbers = #tpu.dot_dimension_numbers<[1], [0], [0], [1], [0, 0, 1, 1], [], []>} : vector<48x16xbf16>, vector<16x32xbf16>, vector<48x32xf32> -> vector<48x32xf32>
    %251 = arith.truncf %248 : vector<16x32xf32> to vector<16x32xbf16>
    %cst_81 = arith.constant dense<0.000000e+00> : vector<48x32xf32>
    %252 = tpu.matmul %243, %251, %cst_81 {dimension_numbers = #tpu.dot_dimension_numbers<[1], [0], [0], [1], [0, 0, 1, 1], [], []>} : vector<48x16xbf16>, vector<16x32xbf16>, vector<48x32xf32> -> vector<48x32xf32>
    %253 = arith.addf %250, %252 : vector<48x32xf32>
    %c0_82 = arith.constant 0 : index
    %c0_83 = arith.constant 0 : index
    %254 = vector.load %arg19[%c0_82, %c0_83] : memref<1x32xf32, #tpu.memory_space<vmem>>, vector<1x32xf32>
    %255 = vector.broadcast %254 : vector<1x32xf32> to vector<48x32xf32>
    %256 = arith.addf %253, %255 : vector<48x32xf32>
    %cst_84 = arith.constant 0.000000e+00 : f32
    %257 = vector.broadcast %cst_84 : f32 to vector<48x32xf32>
    %258 = arith.maximumf %256, %257 : vector<48x32xf32>
    %259 = arith.truncf %258 : vector<48x32xf32> to vector<48x32xbf16>
    %c0_85 = arith.constant 0 : index
    %c0_86 = arith.constant 0 : index
    %260 = vector.load %arg20[%c0_85, %c0_86] : memref<32x16xbf16, #tpu.memory_space<vmem>>, vector<32x16xbf16>
    %cst_87 = arith.constant dense<0.000000e+00> : vector<48x16xf32>
    %261 = tpu.matmul %259, %260, %cst_87 {dimension_numbers = #tpu.dot_dimension_numbers<[1], [0], [0], [1], [0, 0, 1, 1], [], []>} : vector<48x32xbf16>, vector<32x16xbf16>, vector<48x16xf32> -> vector<48x16xf32>
    %c0_88 = arith.constant 0 : index
    %c0_89 = arith.constant 0 : index
    %262 = vector.load %arg21[%c0_88, %c0_89] : memref<1x16xf32, #tpu.memory_space<vmem>>, vector<1x16xf32>
    %263 = vector.broadcast %262 : vector<1x16xf32> to vector<48x16xf32>
    %264 = arith.addf %261, %263 : vector<48x16xf32>
    %cst_90 = arith.constant 0.000000e+00 : f32
    %265 = vector.broadcast %cst_90 : f32 to vector<48x16xf32>
    %266 = arith.maximumf %264, %265 : vector<48x16xf32>
    %267 = arith.truncf %266 : vector<48x16xf32> to vector<48x16xbf16>
    %c0_91 = arith.constant 0 : index
    %c0_92 = arith.constant 0 : index
    %268 = vector.load %arg22[%c0_91, %c0_92] : memref<16x128xbf16, #tpu.memory_space<vmem>>, vector<16x128xbf16>
    %cst_93 = arith.constant dense<0.000000e+00> : vector<48x128xf32>
    %269 = tpu.matmul %267, %268, %cst_93 {dimension_numbers = #tpu.dot_dimension_numbers<[1], [0], [0], [1], [0, 0, 1, 1], [], []>} : vector<48x16xbf16>, vector<16x128xbf16>, vector<48x128xf32> -> vector<48x128xf32>
    %c0_94 = arith.constant 0 : index
    %c0_95 = arith.constant 0 : index
    %270 = vector.load %arg23[%c0_94, %c0_95] : memref<1x128xf32, #tpu.memory_space<vmem>>, vector<1x128xf32>
    %271 = vector.broadcast %270 : vector<1x128xf32> to vector<48x128xf32>
    %272 = arith.addf %269, %271 : vector<48x128xf32>
    %c0_96 = arith.constant 0 : index
    %c0_97 = arith.constant 0 : index
    %273 = vector.load %arg24[%c0_96, %c0_97] : memref<48x128xf32, #tpu.memory_space<vmem>>, vector<48x128xf32>
    tpu.vector_store %arg24[%c0_96, %c0_97], %272 {strides = array<i32>} : memref<48x128xf32, #tpu.memory_space<vmem>>, vector<48x128xf32>,
    return
  }
}

</mosaic_0001>

<llo_original>
// kernel: tpu_custom_call.1
$region0: #{tpu_custom_call.1}
  #allocation0 [shape = 'u32[]', space=smem, size = 0x4, offset = 0x4, fixed_abs, tag = 'smem constant byte address 0x4 - core index']
  #allocation1 [shape = 'u32[144,128]{1,0:T(1,128)}', space=vmem, size = 0x12000, scoped, tag = 'internal scratch']
  #allocation2 [shape = 'f32[16,32]{1,0:T(8,128)}', space=vmem, size = 0x2000, scoped, tag = 'scratch operand']
  %s0 = inlined_call_operand.vmem [shape: s32[48,1], index: 0, kind: input, shape index: {}]
  %s1 = inlined_call_operand.vmem [shape: s32[48,1], index: 1, kind: input, shape index: {}]
  %s2 = inlined_call_operand.vmem [shape: f32[16,4], index: 2, kind: input, shape index: {}]
  %s3 = inlined_call_operand.vmem [shape: bf16[16,16], index: 3, kind: input, shape index: {}]
  %s4 = inlined_call_operand.vmem [shape: f32[16,1], index: 4, kind: input, shape index: {}]
  %s5 = inlined_call_operand.vmem [shape: bf16[4,32], index: 5, kind: input, shape index: {}]
  %s6 = inlined_call_operand.vmem [shape: f32[1,32], index: 6, kind: input, shape index: {}]
  %s7 = inlined_call_operand.vmem [shape: bf16[32,32], index: 7, kind: input, shape index: {}]
  %s8 = inlined_call_operand.vmem [shape: f32[8,4], index: 8, kind: input, shape index: {}]
  %s9 = inlined_call_operand.vmem [shape: f32[4,8], index: 9, kind: input, shape index: {}]
  %s10 = inlined_call_operand.vmem [shape: f32[1,32], index: 10, kind: input, shape index: {}]
  %s11 = inlined_call_operand.vmem [shape: f32[1,32], index: 11, kind: input, shape index: {}]
  %s12 = inlined_call_operand.vmem [shape: bf16[32,32], index: 12, kind: input, shape index: {}]
  %s13 = inlined_call_operand.vmem [shape: f32[32,1], index: 13, kind: input, shape index: {}]
  %s14 = inlined_call_operand.vmem [shape: f32[1,32], index: 14, kind: input, shape index: {}]
  %s15 = inlined_call_operand.vmem [shape: f32[1,32], index: 15, kind: input, shape index: {}]
  %s16 = inlined_call_operand.vmem [shape: f32[1,32], index: 16, kind: input, shape index: {}]
  %s17 = inlined_call_operand.vmem [shape: bf16[32,32], index: 17, kind: input, shape index: {}]
  %s18 = inlined_call_operand.vmem [shape: bf16[32,32], index: 18, kind: input, shape index: {}]
  %s19 = inlined_call_operand.vmem [shape: f32[1,32], index: 19, kind: input, shape index: {}]
  %s20 = inlined_call_operand.vmem [shape: bf16[32,16], index: 20, kind: input, shape index: {}]
  %s21 = inlined_call_operand.vmem [shape: f32[1,16], index: 21, kind: input, shape index: {}]
  %s22 = inlined_call_operand.vmem [shape: bf16[16,128], index: 22, kind: input, shape index: {}]
  %s23 = inlined_call_operand.vmem [shape: f32[1,128], index: 23, kind: input, shape index: {}]
  %s24 = inlined_call_operand.hbm [shape: f32[48,128], index: 24, kind: output, shape index: {}]
  %s25 = sld [smem:[#allocation0]]
  $region106: #{tpu_custom_call.1} parent=0
    _
  %s27 = ssub.s32 1, %s25
  %s28 = scalar_select 0, %s27, %s25
  $region1: #{tpu_custom_call.1} parent=0
    #allocation3 [shape = 'u8[24576]{0}', space=vmem, size = 0x6000, scoped, tag = 'output window, operand 0, single buffered']
    #allocation4 [shape = 's32[1]{0}', space=sflag, size = 0x4, scoped, tag = 'scoped memory for tpu_custom_call.1']
    %29 = vsyncpa [#allocation4], 0
    // Predicated region
    $region2: #{tpu_custom_call.1} parent=1 // pred_check
      _
    $region3: #{tpu_custom_call.1} parent=1 // pred_check_branch
      %31 = sbr.rel (0) target = $region5
    $region4: #{tpu_custom_call.1} parent=1 // pred_region
      _
    $region5: #{tpu_custom_call.1} parent=1 // pred_fallthru
      _
    // Predicated region
    $region6: #{tpu_custom_call.1} parent=1 // pred_check
      _
    $region7: #{tpu_custom_call.1} parent=1 // pred_check_branch
      %33 = sbr.rel (0) target = $region9
    $region8: #{tpu_custom_call.1} parent=1 // pred_region
      _
    $region9: #{tpu_custom_call.1} parent=1 // pred_fallthru
      _
    // Predicated region
    $region10: #{tpu_custom_call.1} parent=1 // pred_check
      _
    $region11: #{tpu_custom_call.1} parent=1 // pred_check_branch
      %35 = sbr.rel (0) target = $region13
    $region12: #{tpu_custom_call.1} parent=1 // pred_region
      _
    $region13: #{tpu_custom_call.1} parent=1 // pred_fallthru
      _
    // Predicated region
    $region14: #{tpu_custom_call.1} parent=1 // pred_check
      _
    $region15: #{tpu_custom_call.1} parent=1 // pred_check_branch
      %37 = sbr.rel (0) target = $region17
    $region16: #{tpu_custom_call.1} parent=1 // pred_region
      _
    $region17: #{tpu_custom_call.1} parent=1 // pred_fallthru
      _
    // Predicated region
    $region18: #{tpu_custom_call.1} parent=1 // pred_check
      _
    $region19: #{tpu_custom_call.1} parent=1 // pred_check_branch
      %39 = sbr.rel (0) target = $region21
    $region20: #{tpu_custom_call.1} parent=1 // pred_region
      _
    $region21: #{tpu_custom_call.1} parent=1 // pred_fallthru
      _
    // Predicated region
    $region22: #{tpu_custom_call.1} parent=1 // pred_check
      _
    $region23: #{tpu_custom_call.1} parent=1 // pred_check_branch
      %41 = sbr.rel (0) target = $region25
    $region24: #{tpu_custom_call.1} parent=1 // pred_region
      _
    $region25: #{tpu_custom_call.1} parent=1 // pred_fallthru
      _
    // Predicated region
    $region26: #{tpu_custom_call.1} parent=1 // pred_check
      _
    $region27: #{tpu_custom_call.1} parent=1 // pred_check_branch
      %43 = sbr.rel (0) target = $region29
    $region28: #{tpu_custom_call.1} parent=1 // pred_region
      _
    $region29: #{tpu_custom_call.1} parent=1 // pred_fallthru
      _
    // Predicated region
    $region30: #{tpu_custom_call.1} parent=1 // pred_check
      _
    $region31: #{tpu_custom_call.1} parent=1 // pred_check_branch
      %45 = sbr.rel (0) target = $region33
    $region32: #{tpu_custom_call.1} parent=1 // pred_region
      _
    $region33: #{tpu_custom_call.1} parent=1 // pred_fallthru
      _
    // Predicated region
    $region34: #{tpu_custom_call.1} parent=1 // pred_check
      _
    $region35: #{tpu_custom_call.1} parent=1 // pred_check_branch
      %47 = sbr.rel (0) target = $region37
    $region36: #{tpu_custom_call.1} parent=1 // pred_region
      _
    $region37: #{tpu_custom_call.1} parent=1 // pred_fallthru
      _
    // Predicated region
    $region38: #{tpu_custom_call.1} parent=1 // pred_check
      _
    $region39: #{tpu_custom_call.1} parent=1 // pred_check_branch
      %49 = sbr.rel (0) target = $region41
    $region40: #{tpu_custom_call.1} parent=1 // pred_region
      _
    $region41: #{tpu_custom_call.1} parent=1 // pred_fallthru
      _
    // Predicated region
    $region42: #{tpu_custom_call.1} parent=1 // pred_check
      _
    $region43: #{tpu_custom_call.1} parent=1 // pred_check_branch
      %51 = sbr.rel (0) target = $region45
    $region44: #{tpu_custom_call.1} parent=1 // pred_region
      _
    $region45: #{tpu_custom_call.1} parent=1 // pred_fallthru
      _
    // Predicated region
    $region46: #{tpu_custom_call.1} parent=1 // pred_check
      _
    $region47: #{tpu_custom_call.1} parent=1 // pred_check_branch
      %53 = sbr.rel (0) target = $region49
    $region48: #{tpu_custom_call.1} parent=1 // pred_region
      _
    $region49: #{tpu_custom_call.1} parent=1 // pred_fallthru
      _
    // Predicated region
    $region50: #{tpu_custom_call.1} parent=1 // pred_check
      _
    $region51: #{tpu_custom_call.1} parent=1 // pred_check_branch
      %55 = sbr.rel (0) target = $region53
    $region52: #{tpu_custom_call.1} parent=1 // pred_region
      _
    $region53: #{tpu_custom_call.1} parent=1 // pred_fallthru
      _
    // Predicated region
    $region54: #{tpu_custom_call.1} parent=1 // pred_check
      _
    $region55: #{tpu_custom_call.1} parent=1 // pred_check_branch
      %57 = sbr.rel (0) target = $region57
    $region56: #{tpu_custom_call.1} parent=1 // pred_region
      _
    $region57: #{tpu_custom_call.1} parent=1 // pred_fallthru
      _
    // Predicated region
    $region58: #{tpu_custom_call.1} parent=1 // pred_check
      _
    $region59: #{tpu_custom_call.1} parent=1 // pred_check_branch
      %59 = sbr.rel (0) target = $region61
    $region60: #{tpu_custom_call.1} parent=1 // pred_region
      _
    $region61: #{tpu_custom_call.1} parent=1 // pred_fallthru
      _
    // Predicated region
    $region62: #{tpu_custom_call.1} parent=1 // pred_check
      _
    $region63: #{tpu_custom_call.1} parent=1 // pred_check_branch
      %61 = sbr.rel (0) target = $region65
    $region64: #{tpu_custom_call.1} parent=1 // pred_region
      _
    $region65: #{tpu_custom_call.1} parent=1 // pred_fallthru
      _
    // Predicated region
    $region66: #{tpu_custom_call.1} parent=1 // pred_check
      _
    $region67: #{tpu_custom_call.1} parent=1 // pred_check_branch
      %63 = sbr.rel (0) target = $region69
    $region68: #{tpu_custom_call.1} parent=1 // pred_region
      _
    $region69: #{tpu_custom_call.1} parent=1 // pred_fallthru
      _
    // Predicated region
    $region70: #{tpu_custom_call.1} parent=1 // pred_check
      _
    $region71: #{tpu_custom_call.1} parent=1 // pred_check_branch
      %65 = sbr.rel (0) target = $region73
    $region72: #{tpu_custom_call.1} parent=1 // pred_region
      _
    $region73: #{tpu_custom_call.1} parent=1 // pred_fallthru
      _
    // Predicated region
    $region74: #{tpu_custom_call.1} parent=1 // pred_check
      _
    $region75: #{tpu_custom_call.1} parent=1 // pred_check_branch
      %67 = sbr.rel (0) target = $region77
    $region76: #{tpu_custom_call.1} parent=1 // pred_region
      _
    $region77: #{tpu_custom_call.1} parent=1 // pred_fallthru
      _
    // Predicated region
    $region78: #{tpu_custom_call.1} parent=1 // pred_check
      _
    $region79: #{tpu_custom_call.1} parent=1 // pred_check_branch
      %69 = sbr.rel (0) target = $region81
    $region80: #{tpu_custom_call.1} parent=1 // pred_region
      _
    $region81: #{tpu_custom_call.1} parent=1 // pred_fallthru
      _
    // Predicated region
    $region82: #{tpu_custom_call.1} parent=1 // pred_check
      _
    $region83: #{tpu_custom_call.1} parent=1 // pred_check_branch
      %71 = sbr.rel (0) target = $region85
    $region84: #{tpu_custom_call.1} parent=1 // pred_region
      _
    $region85: #{tpu_custom_call.1} parent=1 // pred_fallthru
      _
    // Predicated region
    $region86: #{tpu_custom_call.1} parent=1 // pred_check
      _
    $region87: #{tpu_custom_call.1} parent=1 // pred_check_branch
      %73 = sbr.rel (0) target = $region89
    $region88: #{tpu_custom_call.1} parent=1 // pred_region
      _
    $region89: #{tpu_custom_call.1} parent=1 // pred_fallthru
      _
    // Predicated region
    $region90: #{tpu_custom_call.1} parent=1 // pred_check
      _
    $region91: #{tpu_custom_call.1} parent=1 // pred_check_branch
      %75 = sbr.rel (0) target = $region93
    $region92: #{tpu_custom_call.1} parent=1 // pred_region
      _
    $region93: #{tpu_custom_call.1} parent=1 // pred_fallthru
      _
    // Predicated region
    $region94: #{tpu_custom_call.1} parent=1 // pred_check
      _
    $region95: #{tpu_custom_call.1} parent=1 // pred_check_branch
      %77 = sbr.rel (0) target = $region97
    $region96: #{tpu_custom_call.1} parent=1 // pred_region
      _
    $region97: #{tpu_custom_call.1} parent=1 // pred_fallthru
      _
    %v81 = vld [vmem:[%s3] sm:$0xf]
    %v82 = vld [vmem:[%s3 + $0x4] sm:$0xf]
    %vm83 = vcmp.gt.bf16.partialorder %v81, 0
    %vm84 = vcmp.gt.bf16.partialorder %v82, 0
    %v85 = vld [vmem:[%s4] sm:$0xff]
    %v86 = vld [vmem:[%s4 + $0x8] sm:$0xff]
    %v87 = vld [vmem:[%s2] sm:$0xff]
    %v88 = vld [vmem:[%s2 + $0x8] sm:$0xff]
    %v89 = vpack.c.bf16 %v88, %v87
    %v90 = vld [vmem:[%s5] sm:$0x3]
    %v91 = vld [vmem:[%s6] sm:$0x1]
    %v93 = vlaneseq
    %v94 = vshrl.u32 %v93, 7
    %v95 = vsub.s32 0, %v94
    %v96 = vrot.slane %v91, %v95
    %vm98 = vcmask 31744
    %v100 = vsel %vm98, %v89, 0
    %vm102 = vcmask 1041408
    %v104 = vsel %vm102, %v90, 0
    %106 = vmatprep.subr.bf16.mxu0 0
    %107 = vmatpush1.bf16.msra.mxu0 %v104
    %108 = vmatprep.subr.bf16.mxu0 0
    %109 = vmatpush1.bf16.msra.mxu0 0
    %110 = vmatprep.subr.bf16.mxu0 0
    %111 = vmatpush1.bf16.msra.mxu0 0
    %112 = vmatprep.subr.bf16.mxu0 0
    %113 = vmatpush1.bf16.msra.mxu0 0
    %114 = vmatprep.subr.bf16.mxu0 0
    %115 = vmatpush1.bf16.msra.mxu0 0
    %116 = vmatprep.subr.bf16.mxu0 0
    %117 = vmatpush1.bf16.msra.mxu0 0
    %118 = vmatprep.subr.bf16.mxu0 0
    %119 = vmatpush1.bf16.msra.mxu0 0
    %120 = vmatprep.subr.bf16.mxu0 0
    %121 = vmatpush1.bf16.msra.mxu0 0
    %122 = vmatprep.subr.bf16.mxu0 0
    %123 = vmatpush1.bf16.msra.mxu0 0
    %124 = vmatprep.subr.bf16.mxu0 0
    %125 = vmatpush1.bf16.msra.mxu0 0
    %126 = vmatprep.subr.bf16.mxu0 0
    %127 = vmatpush1.bf16.msra.mxu0 0
    %128 = vmatprep.subr.bf16.mxu0 0
    %129 = vmatpush1.bf16.msra.mxu0 0
    %130 = vmatprep.subr.bf16.mxu0 0
    %131 = vmatpush1.bf16.msra.mxu0 0
    %132 = vmatprep.subr.bf16.mxu0 0
    %133 = vmatpush1.bf16.msra.mxu0 0
    %134 = vmatprep.subr.bf16.mxu0 0
    %135 = vmatpush1.bf16.msra.mxu0 0
    %136 = vmatprep.subr.bf16.mxu0 0
    %137 = vmatpush1.bf16.msra.mxu0 0
    %138 = vmatprep.mubr.bf16.mxu0 0
    %139 = vmatmul.mubr.bf16.gmra.mrb[0].mxu0 %v100
    %v140 = vpop.f32.mrb[0].mxu0
    %v141 = vadd.f32 %v96, %v140
    %v142 = vpop.f32.mrb[0].mxu0
    %v143 = vpop.f32.mrb[0].mxu0
    %v144 = vadd.f32 %v96, %v143
    %v145 = vpop.f32.mrb[0].mxu0
    %146 = vdwg.mxu0
    %v147 = vpack.c.bf16 %v144, %v141
    %v148 = vld [vmem:[%s7] sm:$0xf]
    %v149 = vld [vmem:[%s7 + $0x4] sm:$0xf]
    %v150 = vld [vmem:[%s7 + $0x8] sm:$0xf]
    %v151 = vld [vmem:[%s7 + $0xc] sm:$0xf]
    %v156 = vunpack.c.l.b16 %v148
    %v157 = vunpack.c.l.b16 %v149
    %v158 = vunpack.c.l.b16 %v150
    %v159 = vunpack.c.l.b16 %v151
    %v160 = vpack.c.b16 %v157, %v156
    %v161 = vpack.c.b16 %v159, %v158
    %vm164 = vcmask 261120
    %v166 = vsel %vm164, %v147, 0
    %168 = vmatprep.subr.bf16.mxu0 0
    %169 = vmatpush1.bf16.msra.mxu0 %v160
    %170 = vmatprep.subr.bf16.mxu0 0
    %171 = vmatpush1.bf16.msra.mxu0 %v161
    %172 = vmatprep.subr.bf16.mxu0 0
    %173 = vmatpush1.bf16.msra.mxu0 0
    %174 = vmatprep.subr.bf16.mxu0 0
    %175 = vmatpush1.bf16.msra.mxu0 0
    %176 = vmatprep.subr.bf16.mxu0 0
    %177 = vmatpush1.bf16.msra.mxu0 0
    %178 = vmatprep.subr.bf16.mxu0 0
    %179 = vmatpush1.bf16.msra.mxu0 0
    %180 = vmatprep.subr.bf16.mxu0 0
    %181 = vmatpush1.bf16.msra.mxu0 0
    %182 = vmatprep.subr.bf16.mxu0 0
    %183 = vmatpush1.bf16.msra.mxu0 0
    %184 = vmatprep.subr.bf16.mxu0 0
    %185 = vmatpush1.bf16.msra.mxu0 0
    %186 = vmatprep.subr.bf16.mxu0 0
    %187 = vmatpush1.bf16.msra.mxu0 0
    %188 = vmatprep.subr.bf16.mxu0 0
    %189 = vmatpush1.bf16.msra.mxu0 0
    %190 = vmatprep.subr.bf16.mxu0 0
    %191 = vmatpush1.bf16.msra.mxu0 0
    %192 = vmatprep.subr.bf16.mxu0 0
    %193 = vmatpush1.bf16.msra.mxu0 0
    %194 = vmatprep.subr.bf16.mxu0 0
    %195 = vmatpush1.bf16.msra.mxu0 0
    %196 = vmatprep.subr.bf16.mxu0 0
    %197 = vmatpush1.bf16.msra.mxu0 0
    %198 = vmatprep.subr.bf16.mxu0 0
    %199 = vmatpush1.bf16.msra.mxu0 0
    %200 = vmatprep.mubr.bf16.mxu0 0
    %201 = vmatmul.mubr.bf16.gmra.mrb[0].mxu0 %v166
    %v202 = vpop.f32.mrb[0].mxu0
    %v203 = vadd.f32 0.0, %v202
    %v204 = vpop.f32.mrb[0].mxu0
    %v205 = vpop.f32.mrb[0].mxu0
    %v206 = vadd.f32 0.0, %v205
    %v207 = vpop.f32.mrb[0].mxu0
    %208 = vdwg.mxu0
    %209 = vxpose.xlu0.b32.start [1/16] %v203, 128
    %210 = vxpose.xlu0.b32.cont [2/16] %v206, 128
    %211 = vxpose.xlu0.b32.cont [3/16] 0.0, 128
    %212 = vxpose.xlu0.b32.cont [4/16] 0.0, 128
    %213 = vxpose.xlu0.b32.cont [5/16] 0.0, 128
    %214 = vxpose.xlu0.b32.cont [6/16] 0.0, 128
    %215 = vxpose.xlu0.b32.cont [7/16] 0.0, 128
    %216 = vxpose.xlu0.b32.cont [8/16] 0.0, 128
    %217 = vxpose.xlu0.b32.cont [9/16] 0.0, 128
    %218 = vxpose.xlu0.b32.cont [10/16] 0.0, 128
    %219 = vxpose.xlu0.b32.cont [11/16] 0.0, 128
    %220 = vxpose.xlu0.b32.cont [12/16] 0.0, 128
    %221 = vxpose.xlu0.b32.cont [13/16] 0.0, 128
    %222 = vxpose.xlu0.b32.cont [14/16] 0.0, 128
    %223 = vxpose.xlu0.b32.cont [15/16] 0.0, 128
    %224 = vxpose.xlu0.b32.end [16/16] 0.0, 128
    %v225 = vpop.trf.xlu0
    %v226 = vpop.trf.xlu0
    %v227 = vpop.trf.xlu0
    %v228 = vpop.trf.xlu0
    %v229 = vpop.trf.xlu0
    %v230 = vpop.trf.xlu0
    %v231 = vpop.trf.xlu0
    %v232 = vpop.trf.xlu0
    %v233 = vpop.trf.xlu0
    %v234 = vpop.trf.xlu0
    %v235 = vpop.trf.xlu0
    %v236 = vpop.trf.xlu0
    %v237 = vpop.trf.xlu0
    %v238 = vpop.trf.xlu0
    %v239 = vpop.trf.xlu0
    %v240 = vpop.trf.xlu0
    %v241 = vld [vmem:[%s8] sm:$0xff]
    %v242 = vld [vmem:[%s9] sm:$0xf]
    %v243 = vlaneseq
    %v244 = vshrl.u32 %v243, 7
    %v245 = vsub.s32 0, %v244
    %v246 = vrot.slane %v242, %v245
    %v247 = vmul.f32 %v203, %v246
    %v248 = vmul.f32 %v206, %v246
    %vm249 = vcmask 64512
    %v250 = vsel %vm249, %v247, 0.0
    %251 = vadd.xlane.f32.xlu0 %v250
    %v252 = vpop.xlane.xlu0 %251
    %v253 = vsel %vm249, %v248, 0.0
    %254 = vadd.xlane.f32.xlu0 %v253
    %v255 = vpop.xlane.xlu0 %254
    %257 = vset.pattern.permute.xlu0 0
    %258 = vperm.xlu0 %257, %v241
    %v259 = vpop.permute.xlu0 %258
    %v261 = vmul.f32 %v225, %v259
    %vm262 = vcmask 130048
    %v263 = vsel %vm262, %v261, 0.0
    %v264 = vrot.slane %v263, 4
    %v265 = vadd.f32 %v263, %v264
    %v266 = vrot.slane %v265, 2
    %v267 = vadd.f32 %v265, %v266
    %v268 = vrot.slane %v267, 1
    %v269 = vadd.f32 %v267, %v268
    %v270 = vadd.f32 %v252, %v269
    %v271 = vadd.f32 %v255, %v269
    %v272 = vlaneseq
    %v273 = vshrl.u32 %v272, 7
    %v274 = vsub.s32 1, %v273
    %v275 = vrot.slane %v242, %v274
    %277 = vrot.lane.b32.xlu0 %v275, 8
    %v278 = vpop.permute.xlu0 %277
    %v280 = vmul.f32 %v203, %v278
    %v281 = vmul.f32 %v206, %v278
    %284 = vrot.lane.b32.xlu0 %v280, 120
    %v285 = vpop.permute.xlu0 %284
    %286 = vrot.lane.b32.xlu0 %v281, 120
    %v287 = vpop.permute.xlu0 %286
    %v290 = vsel %vm249, %v285, 0.0
    %291 = vadd.xlane.f32.xlu0 %v290
    %v292 = vpop.xlane.xlu0 %291
    %v293 = vsel %vm249, %v287, 0.0
    %294 = vadd.xlane.f32.xlu0 %v293
    %v295 = vpop.xlane.xlu0 %294
    %296 = vset.pattern.permute.xlu0 1
    %297 = vperm.xlu0 %296, %v241
    %v298 = vpop.permute.xlu0 %297
    %v300 = vmul.f32 %v226, %v298
    %v301 = vsel %vm262, %v300, 0.0
    %v302 = vrot.slane %v301, 4
    %v303 = vadd.f32 %v301, %v302
    %v304 = vrot.slane %v303, 2
    %v305 = vadd.f32 %v303, %v304
    %v306 = vrot.slane %v305, 1
    %v307 = vadd.f32 %v305, %v306
    %v308 = vadd.f32 %v292, %v307
    %v309 = vadd.f32 %v295, %v307
    %v310 = vlaneseq
    %v311 = vshrl.u32 %v310, 7
    %v312 = vsub.s32 2, %v311
    %v313 = vrot.slane %v242, %v312
    %315 = vrot.lane.b32.xlu0 %v313, 16
    %v316 = vpop.permute.xlu0 %315
    %v318 = vmul.f32 %v203, %v316
    %v319 = vmul.f32 %v206, %v316
    %322 = vrot.lane.b32.xlu0 %v318, 112
    %v323 = vpop.permute.xlu0 %322
    %324 = vrot.lane.b32.xlu0 %v319, 112
    %v325 = vpop.permute.xlu0 %324
    %v328 = vsel %vm249, %v323, 0.0
    %329 = vadd.xlane.f32.xlu0 %v328
    %v330 = vpop.xlane.xlu0 %329
    %v331 = vsel %vm249, %v325, 0.0
    %332 = vadd.xlane.f32.xlu0 %v331
    %v333 = vpop.xlane.xlu0 %332
    %334 = vset.pattern.permute.xlu0 2
    %335 = vperm.xlu0 %334, %v241
    %v336 = vpop.permute.xlu0 %335
    %v338 = vmul.f32 %v227, %v336
    %v339 = vsel %vm262, %v338, 0.0
    %v340 = vrot.slane %v339, 4
    %v341 = vadd.f32 %v339, %v340
    %v342 = vrot.slane %v341, 2
    %v343 = vadd.f32 %v341, %v342
    %v344 = vrot.slane %v343, 1
    %v345 = vadd.f32 %v343, %v344
    %v346 = vadd.f32 %v330, %v345
    %v347 = vadd.f32 %v333, %v345
    %v348 = vlaneseq
    %v349 = vshrl.u32 %v348, 7
    %v350 = vsub.s32 3, %v349
    %v351 = vrot.slane %v242, %v350
    %353 = vrot.lane.b32.xlu0 %v351, 24
    %v354 = vpop.permute.xlu0 %353
    %v356 = vmul.f32 %v203, %v354
    %v357 = vmul.f32 %v206, %v354
    %360 = vrot.lane.b32.xlu0 %v356, 104
    %v361 = vpop.permute.xlu0 %360
    %362 = vrot.lane.b32.xlu0 %v357, 104
    %v363 = vpop.permute.xlu0 %362
    %v366 = vsel %vm249, %v361, 0.0
    %367 = vadd.xlane.f32.xlu0 %v366
    %v368 = vpop.xlane.xlu0 %367
    %v369 = vsel %vm249, %v363, 0.0
    %370 = vadd.xlane.f32.xlu0 %v369
    %v371 = vpop.xlane.xlu0 %370
    %372 = vset.pattern.permute.xlu0 3
    %373 = vperm.xlu0 %372, %v241
    %v374 = vpop.permute.xlu0 %373
    %v376 = vmul.f32 %v228, %v374
    %v377 = vsel %vm262, %v376, 0.0
    %v378 = vrot.slane %v377, 4
    %v379 = vadd.f32 %v377, %v378
    %v380 = vrot.slane %v379, 2
    %v381 = vadd.f32 %v379, %v380
    %v382 = vrot.slane %v381, 1
    %v383 = vadd.f32 %v381, %v382
    %v384 = vadd.f32 %v368, %v383
    %v385 = vadd.f32 %v371, %v383
    %388 = vrot.lane.b32.xlu0 %v203, 120
    %v389 = vpop.permute.xlu0 %388
    %390 = vrot.lane.b32.xlu0 %v206, 120
    %v391 = vpop.permute.xlu0 %390
    %394 = vrot.lane.b32.xlu0 %v203, 112
    %v395 = vpop.permute.xlu0 %394
    %396 = vrot.lane.b32.xlu0 %v206, 112
    %v397 = vpop.permute.xlu0 %396
    %400 = vrot.lane.b32.xlu0 %v203, 104
    %v401 = vpop.permute.xlu0 %400
    %402 = vrot.lane.b32.xlu0 %v206, 104
    %v403 = vpop.permute.xlu0 %402
    %vm406 = vcmp.gt.f32.partialorder %v270, 0.0
    %vm407 = vcmp.gt.f32.partialorder %v271, 0.0
    %vm408 = vcmp.gt.f32.partialorder %v308, 0.0
    %vm409 = vcmp.gt.f32.partialorder %v309, 0.0
    %vm410 = vcmp.gt.f32.partialorder %v346, 0.0
    %vm411 = vcmp.gt.f32.partialorder %v347, 0.0
    %vm412 = vcmp.gt.f32.partialorder %v384, 0.0
    %vm413 = vcmp.gt.f32.partialorder %v385, 0.0
    %v414 = vmul.f32 %v270, 0.2
    %v415 = vmul.f32 %v271, 0.2
    %v416 = vmul.f32 %v308, 0.2
    %v417 = vmul.f32 %v309, 0.2
    %v418 = vmul.f32 %v346, 0.2
    %v419 = vmul.f32 %v347, 0.2
    %v420 = vmul.f32 %v384, 0.2
    %v421 = vmul.f32 %v385, 0.2
    %v422 = vsel %vm406, %v270, %v414
    %v423 = vsel %vm407, %v271, %v415
    %v424 = vsel %vm408, %v308, %v416
    %v425 = vsel %vm409, %v309, %v417
    %v426 = vsel %vm410, %v346, %v418
    %v427 = vsel %vm411, %v347, %v419
    %v428 = vsel %vm412, %v384, %v420
    %v429 = vsel %vm413, %v385, %v421
    %v430 = vsel %vm83, 65537, 0
    %v431 = vsel %vm84, 65537, 0
    %v432 = vunpack.c.l.b16 %v430
    %v433 = vunpack.c.l.b16 %v431
    %vm434 = vcmp.ne.s32.totalorder %v432, 0
    %vm435 = vcmp.ne.s32.totalorder %v433, 0
    %v436 = vsel %vm434, 1, 0
    %v437 = vsel %vm435, 1, 0
    %vm438 = vcmp.eq.s32.totalorder %v436, 1
    %vm439 = vcmp.eq.s32.totalorder %v437, 1
    %v440 = vsel %vm438, %v422, -1e+09
    %v441 = vsel %vm439, %v423, -1e+09
    %v442 = vsel %vm438, %v424, -1e+09
    %v443 = vsel %vm439, %v425, -1e+09
    %v444 = vsel %vm438, %v426, -1e+09
    %v445 = vsel %vm439, %v427, -1e+09
    %v446 = vsel %vm438, %v428, -1e+09
    %v447 = vsel %vm439, %v429, -1e+09
    %v448 = vsel %vm262, %v440, -inf
    %449 = vmax.xlane.f32.xlu0 %v448
    %v450 = vpop.xlane.xlu0 %449
    %v451 = vsel %vm262, %v441, -inf
    %452 = vmax.xlane.f32.xlu0 %v451
    %v453 = vpop.xlane.xlu0 %452
    %v454 = vsel %vm262, %v442, -inf
    %455 = vmax.xlane.f32.xlu0 %v454
    %v456 = vpop.xlane.xlu0 %455
    %v457 = vsel %vm262, %v443, -inf
    %458 = vmax.xlane.f32.xlu0 %v457
    %v459 = vpop.xlane.xlu0 %458
    %v460 = vsel %vm262, %v444, -inf
    %461 = vmax.xlane.f32.xlu0 %v460
    %v462 = vpop.xlane.xlu0 %461
    %v463 = vsel %vm262, %v445, -inf
    %464 = vmax.xlane.f32.xlu0 %v463
    %v465 = vpop.xlane.xlu0 %464
    %v466 = vsel %vm262, %v446, -inf
    %467 = vmax.xlane.f32.xlu0 %v466
    %v468 = vpop.xlane.xlu0 %467
    %v469 = vsel %vm262, %v447, -inf
    %470 = vmax.xlane.f32.xlu0 %v469
    %v471 = vpop.xlane.xlu0 %470
    %v472 = vsub.f32 %v440, %v450
    %v473 = vsub.f32 %v441, %v453
    %v474 = vsub.f32 %v442, %v456
    %v475 = vsub.f32 %v443, %v459
    %v476 = vsub.f32 %v444, %v462
    %v477 = vsub.f32 %v445, %v465
    %v478 = vsub.f32 %v446, %v468
    %v479 = vsub.f32 %v447, %v471
    %v480 = vmul.f32 %v472, 1.442695
    %v481 = vpow.pop %v480
    %v482 = vmul.f32 %v473, 1.442695
    %v483 = vpow.pop %v482
    %v484 = vmul.f32 %v474, 1.442695
    %v485 = vpow.pop %v484
    %v486 = vmul.f32 %v475, 1.442695
    %v487 = vpow.pop %v486
    %v488 = vmul.f32 %v476, 1.442695
    %v489 = vpow.pop %v488
    %v490 = vmul.f32 %v477, 1.442695
    %v491 = vpow.pop %v490
    %v492 = vmul.f32 %v478, 1.442695
    %v493 = vpow.pop %v492
    %v494 = vmul.f32 %v479, 1.442695
    %v495 = vpow.pop %v494
    %v496 = vsel %vm262, %v481, 0.0
    %497 = vadd.xlane.f32.xlu0 %v496
    %v498 = vpop.xlane.xlu0 %497
    %v499 = vsel %vm262, %v483, 0.0
    %500 = vadd.xlane.f32.xlu0 %v499
    %v501 = vpop.xlane.xlu0 %500
    %v502 = vsel %vm262, %v485, 0.0
    %503 = vadd.xlane.f32.xlu0 %v502
    %v504 = vpop.xlane.xlu0 %503
    %v505 = vsel %vm262, %v487, 0.0
    %506 = vadd.xlane.f32.xlu0 %v505
    %v507 = vpop.xlane.xlu0 %506
    %v508 = vsel %vm262, %v489, 0.0
    %509 = vadd.xlane.f32.xlu0 %v508
    %v510 = vpop.xlane.xlu0 %509
    %v511 = vsel %vm262, %v491, 0.0
    %512 = vadd.xlane.f32.xlu0 %v511
    %v513 = vpop.xlane.xlu0 %512
    %v514 = vsel %vm262, %v493, 0.0
    %515 = vadd.xlane.f32.xlu0 %v514
    %v516 = vpop.xlane.xlu0 %515
    %v517 = vsel %vm262, %v495, 0.0
    %518 = vadd.xlane.f32.xlu0 %v517
    %v519 = vpop.xlane.xlu0 %518
    %v520 = vrcp.pop %v498
    %v521 = vrcp.pop %v501
    %v522 = vrcp.pop %v504
    %v523 = vrcp.pop %v507
    %v524 = vrcp.pop %v510
    %v525 = vrcp.pop %v513
    %v526 = vrcp.pop %v516
    %v527 = vrcp.pop %v519
    %v528 = vpack.c.bf16 %v483, %v481
    %v529 = vpack.c.bf16 %v206, %v203
    %v531 = vsel %vm262, %v528, 0
    %533 = vmatprep.subr.bf16.mxu0 0
    %534 = vmatpush1.bf16.msra.mxu0 %v529
    %535 = vmatprep.subr.bf16.mxu0 0
    %536 = vmatpush1.bf16.msra.mxu0 0
    %537 = vmatprep.subr.bf16.mxu0 0
    %538 = vmatpush1.bf16.msra.mxu0 0
    %539 = vmatprep.subr.bf16.mxu0 0
    %540 = vmatpush1.bf16.msra.mxu0 0
    %541 = vmatprep.subr.bf16.mxu0 0
    %542 = vmatpush1.bf16.msra.mxu0 0
    %543 = vmatprep.subr.bf16.mxu0 0
    %544 = vmatpush1.bf16.msra.mxu0 0
    %545 = vmatprep.subr.bf16.mxu0 0
    %546 = vmatpush1.bf16.msra.mxu0 0
    %547 = vmatprep.subr.bf16.mxu0 0
    %548 = vmatpush1.bf16.msra.mxu0 0
    %549 = vmatprep.subr.bf16.mxu0 0
    %550 = vmatpush1.bf16.msra.mxu0 0
    %551 = vmatprep.subr.bf16.mxu0 0
    %552 = vmatpush1.bf16.msra.mxu0 0
    %553 = vmatprep.subr.bf16.mxu0 0
    %554 = vmatpush1.bf16.msra.mxu0 0
    %555 = vmatprep.subr.bf16.mxu0 0
    %556 = vmatpush1.bf16.msra.mxu0 0
    %557 = vmatprep.subr.bf16.mxu0 0
    %558 = vmatpush1.bf16.msra.mxu0 0
    %559 = vmatprep.subr.bf16.mxu0 0
    %560 = vmatpush1.bf16.msra.mxu0 0
    %561 = vmatprep.subr.bf16.mxu0 0
    %562 = vmatpush1.bf16.msra.mxu0 0
    %563 = vmatprep.subr.bf16.mxu0 0
    %564 = vmatpush1.bf16.msra.mxu0 0
    %565 = vmatprep.mubr.bf16.mxu0 0
    %566 = vmatmul.mubr.bf16.gmra.mrb[0].mxu0 %v531
    %v567 = vpop.f32.mrb[0].mxu0
    %v568 = vadd.f32 0.0, %v567
    %v569 = vpop.f32.mrb[0].mxu0
    %v570 = vpop.f32.mrb[0].mxu0
    %v571 = vadd.f32 0.0, %v570
    %v572 = vpop.f32.mrb[0].mxu0
    %573 = vdwg.mxu0
    %v574 = vmul.f32 %v568, %v520
    %v575 = vmul.f32 %v571, %v521
    %576 = vst.msk [vmem:[#allocation2] sm:$0xff] %vm249, %v574
    %577 = vst.msk [vmem:[#allocation2 + $0x8] sm:$0xff] %vm249, %v575
    %v578 = vpack.c.bf16 %v487, %v485
    %v579 = vpack.c.bf16 %v391, %v389
    %v581 = vsel %vm262, %v578, 0
    %583 = vmatprep.subr.bf16.mxu0 0
    %584 = vmatpush1.bf16.msra.mxu0 %v579
    %585 = vmatprep.subr.bf16.mxu0 0
    %586 = vmatpush1.bf16.msra.mxu0 0
    %587 = vmatprep.subr.bf16.mxu0 0
    %588 = vmatpush1.bf16.msra.mxu0 0
    %589 = vmatprep.subr.bf16.mxu0 0
    %590 = vmatpush1.bf16.msra.mxu0 0
    %591 = vmatprep.subr.bf16.mxu0 0
    %592 = vmatpush1.bf16.msra.mxu0 0
    %593 = vmatprep.subr.bf16.mxu0 0
    %594 = vmatpush1.bf16.msra.mxu0 0
    %595 = vmatprep.subr.bf16.mxu0 0
    %596 = vmatpush1.bf16.msra.mxu0 0
    %597 = vmatprep.subr.bf16.mxu0 0
    %598 = vmatpush1.bf16.msra.mxu0 0
    %599 = vmatprep.subr.bf16.mxu0 0
    %600 = vmatpush1.bf16.msra.mxu0 0
    %601 = vmatprep.subr.bf16.mxu0 0
    %602 = vmatpush1.bf16.msra.mxu0 0
    %603 = vmatprep.subr.bf16.mxu0 0
    %604 = vmatpush1.bf16.msra.mxu0 0
    %605 = vmatprep.subr.bf16.mxu0 0
    %606 = vmatpush1.bf16.msra.mxu0 0
    %607 = vmatprep.subr.bf16.mxu0 0
    %608 = vmatpush1.bf16.msra.mxu0 0
    %609 = vmatprep.subr.bf16.mxu0 0
    %610 = vmatpush1.bf16.msra.mxu0 0
    %611 = vmatprep.subr.bf16.mxu0 0
    %612 = vmatpush1.bf16.msra.mxu0 0
    %613 = vmatprep.subr.bf16.mxu0 0
    %614 = vmatpush1.bf16.msra.mxu0 0
    %615 = vmatprep.mubr.bf16.mxu0 0
    %616 = vmatmul.mubr.bf16.gmra.mrb[0].mxu0 %v581
    %v617 = vpop.f32.mrb[0].mxu0
    %v618 = vadd.f32 0.0, %v617
    %v619 = vpop.f32.mrb[0].mxu0
    %v620 = vpop.f32.mrb[0].mxu0
    %v621 = vadd.f32 0.0, %v620
    %v622 = vpop.f32.mrb[0].mxu0
    %623 = vdwg.mxu0
    %v624 = vmul.f32 %v618, %v522
    %v625 = vmul.f32 %v621, %v523
    %628 = vrot.lane.b32.xlu0 %v624, 8
    %v629 = vpop.permute.xlu0 %628
    %630 = vrot.lane.b32.xlu0 %v625, 8
    %v631 = vpop.permute.xlu0 %630
    %vm634 = vcmask 130112
    %635 = vst.msk [vmem:[#allocation2] sm:$0xff] %vm634, %v629
    %636 = vst.msk [vmem:[#allocation2 + $0x8] sm:$0xff] %vm634, %v631
    %v637 = vpack.c.bf16 %v491, %v489
    %v638 = vpack.c.bf16 %v397, %v395
    %v640 = vsel %vm262, %v637, 0
    %642 = vmatprep.subr.bf16.mxu0 0
    %643 = vmatpush1.bf16.msra.mxu0 %v638
    %644 = vmatprep.subr.bf16.mxu0 0
    %645 = vmatpush1.bf16.msra.mxu0 0
    %646 = vmatprep.subr.bf16.mxu0 0
    %647 = vmatpush1.bf16.msra.mxu0 0
    %648 = vmatprep.subr.bf16.mxu0 0
    %649 = vmatpush1.bf16.msra.mxu0 0
    %650 = vmatprep.subr.bf16.mxu0 0
    %651 = vmatpush1.bf16.msra.mxu0 0
    %652 = vmatprep.subr.bf16.mxu0 0
    %653 = vmatpush1.bf16.msra.mxu0 0
    %654 = vmatprep.subr.bf16.mxu0 0
    %655 = vmatpush1.bf16.msra.mxu0 0
    %656 = vmatprep.subr.bf16.mxu0 0
    %657 = vmatpush1.bf16.msra.mxu0 0
    %658 = vmatprep.subr.bf16.mxu0 0
    %659 = vmatpush1.bf16.msra.mxu0 0
    %660 = vmatprep.subr.bf16.mxu0 0
    %661 = vmatpush1.bf16.msra.mxu0 0
    %662 = vmatprep.subr.bf16.mxu0 0
    %663 = vmatpush1.bf16.msra.mxu0 0
    %664 = vmatprep.subr.bf16.mxu0 0
    %665 = vmatpush1.bf16.msra.mxu0 0
    %666 = vmatprep.subr.bf16.mxu0 0
    %667 = vmatpush1.bf16.msra.mxu0 0
    %668 = vmatprep.subr.bf16.mxu0 0
    %669 = vmatpush1.bf16.msra.mxu0 0
    %670 = vmatprep.subr.bf16.mxu0 0
    %671 = vmatpush1.bf16.msra.mxu0 0
    %672 = vmatprep.subr.bf16.mxu0 0
    %673 = vmatpush1.bf16.msra.mxu0 0
    %674 = vmatprep.mubr.bf16.mxu0 0
    %675 = vmatmul.mubr.bf16.gmra.mrb[0].mxu0 %v640
    %v676 = vpop.f32.mrb[0].mxu0
    %v677 = vadd.f32 0.0, %v676
    %v678 = vpop.f32.mrb[0].mxu0
    %v679 = vpop.f32.mrb[0].mxu0
    %v680 = vadd.f32 0.0, %v679
    %v681 = vpop.f32.mrb[0].mxu0
    %682 = vdwg.mxu0
    %v683 = vmul.f32 %v677, %v524
    %v684 = vmul.f32 %v680, %v525
    %687 = vrot.lane.b32.xlu0 %v683, 16
    %v688 = vpop.permute.xlu0 %687
    %689 = vrot.lane.b32.xlu0 %v684, 16
    %v690 = vpop.permute.xlu0 %689
    %vm693 = vcmask 195712
    %694 = vst.msk [vmem:[#allocation2] sm:$0xff] %vm693, %v688
    %695 = vst.msk [vmem:[#allocation2 + $0x8] sm:$0xff] %vm693, %v690
    %v696 = vpack.c.bf16 %v495, %v493
    %v697 = vpack.c.bf16 %v403, %v401
    %v699 = vsel %vm262, %v696, 0
    %701 = vmatprep.subr.bf16.mxu0 0
    %702 = vmatpush1.bf16.msra.mxu0 %v697
    %703 = vmatprep.subr.bf16.mxu0 0
    %704 = vmatpush1.bf16.msra.mxu0 0
    %705 = vmatprep.subr.bf16.mxu0 0
    %706 = vmatpush1.bf16.msra.mxu0 0
    %707 = vmatprep.subr.bf16.mxu0 0
    %708 = vmatpush1.bf16.msra.mxu0 0
    %709 = vmatprep.subr.bf16.mxu0 0
    %710 = vmatpush1.bf16.msra.mxu0 0
    %711 = vmatprep.subr.bf16.mxu0 0
    %712 = vmatpush1.bf16.msra.mxu0 0
    %713 = vmatprep.subr.bf16.mxu0 0
    %714 = vmatpush1.bf16.msra.mxu0 0
    %715 = vmatprep.subr.bf16.mxu0 0
    %716 = vmatpush1.bf16.msra.mxu0 0
    %717 = vmatprep.subr.bf16.mxu0 0
    %718 = vmatpush1.bf16.msra.mxu0 0
    %719 = vmatprep.subr.bf16.mxu0 0
    %720 = vmatpush1.bf16.msra.mxu0 0
    %721 = vmatprep.subr.bf16.mxu0 0
    %722 = vmatpush1.bf16.msra.mxu0 0
    %723 = vmatprep.subr.bf16.mxu0 0
    %724 = vmatpush1.bf16.msra.mxu0 0
    %725 = vmatprep.subr.bf16.mxu0 0
    %726 = vmatpush1.bf16.msra.mxu0 0
    %727 = vmatprep.subr.bf16.mxu0 0
    %728 = vmatpush1.bf16.msra.mxu0 0
    %729 = vmatprep.subr.bf16.mxu0 0
    %730 = vmatpush1.bf16.msra.mxu0 0
    %731 = vmatprep.subr.bf16.mxu0 0
    %732 = vmatpush1.bf16.msra.mxu0 0
    %733 = vmatprep.mubr.bf16.mxu0 0
    %734 = vmatmul.mubr.bf16.gmra.mrb[0].mxu0 %v699
    %v735 = vpop.f32.mrb[0].mxu0
    %v736 = vadd.f32 0.0, %v735
    %v737 = vpop.f32.mrb[0].mxu0
    %v738 = vpop.f32.mrb[0].mxu0
    %v739 = vadd.f32 0.0, %v738
    %v740 = vpop.f32.mrb[0].mxu0
    %741 = vdwg.mxu0
    %v742 = vmul.f32 %v736, %v526
    %v743 = vmul.f32 %v739, %v527
    %746 = vrot.lane.b32.xlu0 %v742, 24
    %v747 = vpop.permute.xlu0 %746
    %748 = vrot.lane.b32.xlu0 %v743, 24
    %v749 = vpop.permute.xlu0 %748
    %vm752 = vcmask 261312
    %753 = vst.msk [vmem:[#allocation2] sm:$0xff] %vm752, %v747
    %754 = vst.msk [vmem:[#allocation2 + $0x8] sm:$0xff] %vm752, %v749
    %v755 = vld [vmem:[#allocation2] sm:$0xff]
    %v756 = vld [vmem:[#allocation2 + $0x8] sm:$0xff]
    %758 = vset.pattern.permute.xlu0 0
    %759 = vperm.xlu0 %758, %v85
    %v760 = vpop.permute.xlu0 %759
    %763 = vset.pattern.permute.xlu0 0
    %764 = vperm.xlu0 %763, %v86
    %v765 = vpop.permute.xlu0 %764
    %v767 = vmul.f32 %v755, %v760
    %v768 = vmul.f32 %v756, %v765
    %v769 = vld [vmem:[%s10] sm:$0x1]
    %v771 = vlaneseq
    %v772 = vshrl.u32 %v771, 7
    %v773 = vsub.s32 0, %v772
    %v774 = vrot.slane %v769, %v773
    %v776 = vmul.f32 %v767, %v774
    %v777 = vmul.f32 %v768, %v774
    %v778 = vld [vmem:[%s11] sm:$0x1]
    %v780 = vlaneseq
    %v781 = vshrl.u32 %v780, 7
    %v782 = vsub.s32 0, %v781
    %v783 = vrot.slane %v778, %v782
    %v785 = vadd.f32 %v776, %v783
    %v786 = vadd.f32 %v777, %v783
    %vm787 = vcmp.gt.f32.partialorder %v785, 0.0
    %vm788 = vcmp.gt.f32.partialorder %v786, 0.0
    %v789 = vmin.f32 %v785, 0.0
    %v790 = vmin.f32 %v786, 0.0
    %v791 = vmul.f32 %v789, 1.442695
    %v792 = vpow.pop %v791
    %v793 = vmul.f32 %v790, 1.442695
    %v794 = vpow.pop %v793
    %v795 = vsub.f32 %v792, 1.0
    %v796 = vsub.f32 %v794, 1.0
    %v797 = vsel %vm787, %v785, %v795
    %v798 = vsel %vm788, %v786, %v796
    %v799 = vadd.f32 %v141, %v797
    %v800 = vadd.f32 %v144, %v798
    %v801 = vpack.c.bf16 %v800, %v799
    %v802 = vld [vmem:[%s12] sm:$0xf]
    %v803 = vld [vmem:[%s12 + $0x4] sm:$0xf]
    %v804 = vld [vmem:[%s12 + $0x8] sm:$0xf]
    %v805 = vld [vmem:[%s12 + $0xc] sm:$0xf]
    %v810 = vunpack.c.l.b16 %v802
    %v811 = vunpack.c.l.b16 %v803
    %v812 = vunpack.c.l.b16 %v804
    %v813 = vunpack.c.l.b16 %v805
    %v814 = vpack.c.b16 %v811, %v810
    %v815 = vpack.c.b16 %v813, %v812
    %v819 = vsel %vm164, %v801, 0
    %821 = vmatprep.subr.bf16.mxu0 0
    %822 = vmatpush1.bf16.msra.mxu0 %v814
    %823 = vmatprep.subr.bf16.mxu0 0
    %824 = vmatpush1.bf16.msra.mxu0 %v815
    %825 = vmatprep.subr.bf16.mxu0 0
    %826 = vmatpush1.bf16.msra.mxu0 0
    %827 = vmatprep.subr.bf16.mxu0 0
    %828 = vmatpush1.bf16.msra.mxu0 0
    %829 = vmatprep.subr.bf16.mxu0 0
    %830 = vmatpush1.bf16.msra.mxu0 0
    %831 = vmatprep.subr.bf16.mxu0 0
    %832 = vmatpush1.bf16.msra.mxu0 0
    %833 = vmatprep.subr.bf16.mxu0 0
    %834 = vmatpush1.bf16.msra.mxu0 0
    %835 = vmatprep.subr.bf16.mxu0 0
    %836 = vmatpush1.bf16.msra.mxu0 0
    %837 = vmatprep.subr.bf16.mxu0 0
    %838 = vmatpush1.bf16.msra.mxu0 0
    %839 = vmatprep.subr.bf16.mxu0 0
    %840 = vmatpush1.bf16.msra.mxu0 0
    %841 = vmatprep.subr.bf16.mxu0 0
    %842 = vmatpush1.bf16.msra.mxu0 0
    %843 = vmatprep.subr.bf16.mxu0 0
    %844 = vmatpush1.bf16.msra.mxu0 0
    %845 = vmatprep.subr.bf16.mxu0 0
    %846 = vmatpush1.bf16.msra.mxu0 0
    %847 = vmatprep.subr.bf16.mxu0 0
    %848 = vmatpush1.bf16.msra.mxu0 0
    %849 = vmatprep.subr.bf16.mxu0 0
    %850 = vmatpush1.bf16.msra.mxu0 0
    %851 = vmatprep.subr.bf16.mxu0 0
    %852 = vmatpush1.bf16.msra.mxu0 0
    %853 = vmatprep.mubr.bf16.mxu0 0
    %854 = vmatmul.mubr.bf16.gmra.mrb[0].mxu0 %v819
    %v855 = vpop.f32.mrb[0].mxu0
    %v856 = vadd.f32 0.0, %v855
    %v857 = vpop.f32.mrb[0].mxu0
    %v858 = vpop.f32.mrb[0].mxu0
    %v859 = vadd.f32 0.0, %v858
    %v860 = vpop.f32.mrb[0].mxu0
    %861 = vdwg.mxu0
    %862 = vxpose.xlu0.b32.start [1/16] %v856, 128
    %863 = vxpose.xlu0.b32.cont [2/16] %v859, 128
    %864 = vxpose.xlu0.b32.cont [3/16] 0.0, 128
    %865 = vxpose.xlu0.b32.cont [4/16] 0.0, 128
    %866 = vxpose.xlu0.b32.cont [5/16] 0.0, 128
    %867 = vxpose.xlu0.b32.cont [6/16] 0.0, 128
    %868 = vxpose.xlu0.b32.cont [7/16] 0.0, 128
    %869 = vxpose.xlu0.b32.cont [8/16] 0.0, 128
    %870 = vxpose.xlu0.b32.cont [9/16] 0.0, 128
    %871 = vxpose.xlu0.b32.cont [10/16] 0.0, 128
    %872 = vxpose.xlu0.b32.cont [11/16] 0.0, 128
    %873 = vxpose.xlu0.b32.cont [12/16] 0.0, 128
    %874 = vxpose.xlu0.b32.cont [13/16] 0.0, 128
    %875 = vxpose.xlu0.b32.cont [14/16] 0.0, 128
    %876 = vxpose.xlu0.b32.cont [15/16] 0.0, 128
    %877 = vxpose.xlu0.b32.end [16/16] 0.0, 128
    %v878 = vpop.trf.xlu0
    %v879 = vpop.trf.xlu0
    %v880 = vpop.trf.xlu0
    %v881 = vpop.trf.xlu0
    %v882 = vpop.trf.xlu0
    %v883 = vpop.trf.xlu0
    %v884 = vpop.trf.xlu0
    %v885 = vpop.trf.xlu0
    %v886 = vpop.trf.xlu0
    %v887 = vpop.trf.xlu0
    %v888 = vpop.trf.xlu0
    %v889 = vpop.trf.xlu0
    %v890 = vpop.trf.xlu0
    %v891 = vpop.trf.xlu0
    %v892 = vpop.trf.xlu0
    %v893 = vpop.trf.xlu0
    %v894 = vld [vmem:[%s13] sm:$0xff]
    %v895 = vld [vmem:[%s13 + $0x8] sm:$0xff]
    %v896 = vld [vmem:[%s13 + $0x10] sm:$0xff]
    %v897 = vld [vmem:[%s13 + $0x18] sm:$0xff]
    %v898 = vld [vmem:[%s14] sm:$0x1]
    %v900 = vlaneseq
    %v901 = vshrl.u32 %v900, 7
    %v902 = vsub.s32 0, %v901
    %v903 = vrot.slane %v898, %v902
    %v905 = vmul.f32 %v856, %v903
    %v906 = vmul.f32 %v859, %v903
    %v907 = vsel %vm164, %v905, 0.0
    %908 = vadd.xlane.f32.xlu0 %v907
    %v909 = vpop.xlane.xlu0 %908
    %v910 = vsel %vm164, %v906, 0.0
    %911 = vadd.xlane.f32.xlu0 %v910
    %v912 = vpop.xlane.xlu0 %911
    %914 = vset.pattern.permute.xlu0 0
    %915 = vperm.xlu0 %914, %v894
    %v916 = vpop.permute.xlu0 %915
    %919 = vset.pattern.permute.xlu0 0
    %920 = vperm.xlu0 %919, %v895
    %v921 = vpop.permute.xlu0 %920
    %924 = vset.pattern.permute.xlu0 0
    %925 = vperm.xlu0 %924, %v896
    %v926 = vpop.permute.xlu0 %925
    %929 = vset.pattern.permute.xlu0 0
    %930 = vperm.xlu0 %929, %v897
    %v931 = vpop.permute.xlu0 %930
    %v933 = vmul.f32 %v878, %v916
    %v934 = vmul.f32 %v879, %v921
    %v935 = vmul.f32 %v880, %v926
    %v936 = vmul.f32 %v881, %v931
    %v937 = vsel %vm262, %v933, 0.0
    %v938 = vsel %vm262, %v934, 0.0
    %v939 = vadd.f32 %v937, %v938
    %v940 = vsel %vm262, %v935, 0.0
    %v941 = vadd.f32 %v939, %v940
    %v942 = vsel %vm262, %v936, 0.0
    %v943 = vadd.f32 %v941, %v942
    %v944 = vrot.slane %v943, 4
    %v945 = vadd.f32 %v943, %v944
    %v946 = vrot.slane %v945, 2
    %v947 = vadd.f32 %v945, %v946
    %v948 = vrot.slane %v947, 1
    %v949 = vadd.f32 %v947, %v948
    %v950 = vadd.f32 %v909, %v949
    %v951 = vadd.f32 %v912, %v949
    %vm952 = vcmp.gt.f32.partialorder %v950, 0.0
    %vm953 = vcmp.gt.f32.partialorder %v951, 0.0
    %v954 = vmul.f32 %v950, 0.2
    %v955 = vmul.f32 %v951, 0.2
    %v956 = vsel %vm952, %v950, %v954
    %v957 = vsel %vm953, %v951, %v955
    %v958 = vsel %vm434, %v956, -1e+09
    %v959 = vsel %vm435, %v957, -1e+09
    %v960 = vsel %vm262, %v958, -inf
    %961 = vmax.xlane.f32.xlu0 %v960
    %v962 = vpop.xlane.xlu0 %961
    %v963 = vsel %vm262, %v959, -inf
    %964 = vmax.xlane.f32.xlu0 %v963
    %v965 = vpop.xlane.xlu0 %964
    %v966 = vsub.f32 %v958, %v962
    %v967 = vsub.f32 %v959, %v965
    %v968 = vmul.f32 %v966, 1.442695
    %v969 = vpow.pop %v968
    %v970 = vmul.f32 %v967, 1.442695
    %v971 = vpow.pop %v970
    %v972 = vsel %vm262, %v969, 0.0
    %973 = vadd.xlane.f32.xlu0 %v972
    %v974 = vpop.xlane.xlu0 %973
    %v975 = vsel %vm262, %v971, 0.0
    %976 = vadd.xlane.f32.xlu0 %v975
    %v977 = vpop.xlane.xlu0 %976
    %v978 = vrcp.pop %v974
    %v979 = vrcp.pop %v977
    %v980 = vpack.c.bf16 %v971, %v969
    %v981 = vpack.c.bf16 %v859, %v856
    %v983 = vsel %vm262, %v980, 0
    %985 = vmatprep.subr.bf16.mxu0 0
    %986 = vmatpush1.bf16.msra.mxu0 %v981
    %987 = vmatprep.subr.bf16.mxu0 0
    %988 = vmatpush1.bf16.msra.mxu0 0
    %989 = vmatprep.subr.bf16.mxu0 0
    %990 = vmatpush1.bf16.msra.mxu0 0
    %991 = vmatprep.subr.bf16.mxu0 0
    %992 = vmatpush1.bf16.msra.mxu0 0
    %993 = vmatprep.subr.bf16.mxu0 0
    %994 = vmatpush1.bf16.msra.mxu0 0
    %995 = vmatprep.subr.bf16.mxu0 0
    %996 = vmatpush1.bf16.msra.mxu0 0
    %997 = vmatprep.subr.bf16.mxu0 0
    %998 = vmatpush1.bf16.msra.mxu0 0
    %999 = vmatprep.subr.bf16.mxu0 0
    %1000 = vmatpush1.bf16.msra.mxu0 0
    %1001 = vmatprep.subr.bf16.mxu0 0
    %1002 = vmatpush1.bf16.msra.mxu0 0
    %1003 = vmatprep.subr.bf16.mxu0 0
    %1004 = vmatpush1.bf16.msra.mxu0 0
    %1005 = vmatprep.subr.bf16.mxu0 0
    %1006 = vmatpush1.bf16.msra.mxu0 0
    %1007 = vmatprep.subr.bf16.mxu0 0
    %1008 = vmatpush1.bf16.msra.mxu0 0
    %1009 = vmatprep.subr.bf16.mxu0 0
    %1010 = vmatpush1.bf16.msra.mxu0 0
    %1011 = vmatprep.subr.bf16.mxu0 0
    %1012 = vmatpush1.bf16.msra.mxu0 0
    %1013 = vmatprep.subr.bf16.mxu0 0
    %1014 = vmatpush1.bf16.msra.mxu0 0
    %1015 = vmatprep.subr.bf16.mxu0 0
    %1016 = vmatpush1.bf16.msra.mxu0 0
    %1017 = vmatprep.mubr.bf16.mxu0 0
    %1018 = vmatmul.mubr.bf16.gmra.mrb[0].mxu0 %v983
    %v1019 = vpop.f32.mrb[0].mxu0
    %v1020 = vadd.f32 0.0, %v1019
    %v1021 = vpop.f32.mrb[0].mxu0
    %v1022 = vpop.f32.mrb[0].mxu0
    %v1023 = vadd.f32 0.0, %v1022
    %v1024 = vpop.f32.mrb[0].mxu0
    %1025 = vdwg.mxu0
    %v1026 = vmul.f32 %v1020, %v978
    %v1027 = vmul.f32 %v1023, %v979
    %v1028 = vmul.f32 %v1026, %v760
    %v1029 = vmul.f32 %v1027, %v765
    %v1030 = vld [vmem:[%s15] sm:$0x1]
    %v1032 = vlaneseq
    %v1033 = vshrl.u32 %v1032, 7
    %v1034 = vsub.s32 0, %v1033
    %v1035 = vrot.slane %v1030, %v1034
    %v1037 = vmul.f32 %v1028, %v1035
    %v1038 = vmul.f32 %v1029, %v1035
    %v1039 = vld [vmem:[%s16] sm:$0x1]
    %v1041 = vlaneseq
    %v1042 = vshrl.u32 %v1041, 7
    %v1043 = vsub.s32 0, %v1042
    %v1044 = vrot.slane %v1039, %v1043
    %v1046 = vadd.f32 %v1037, %v1044
    %v1047 = vadd.f32 %v1038, %v1044
    %vm1048 = vcmp.gt.f32.partialorder %v1046, 0.0
    %vm1049 = vcmp.gt.f32.partialorder %v1047, 0.0
    %v1050 = vmin.f32 %v1046, 0.0
    %v1051 = vmin.f32 %v1047, 0.0
    %v1052 = vmul.f32 %v1050, 1.442695
    %v1053 = vpow.pop %v1052
    %v1054 = vmul.f32 %v1051, 1.442695
    %v1055 = vpow.pop %v1054
    %v1056 = vsub.f32 %v1053, 1.0
    %v1057 = vsub.f32 %v1055, 1.0
    %v1058 = vsel %vm1048, %v1046, %v1056
    %v1059 = vsel %vm1049, %v1047, %v1057
    %v1060 = vadd.f32 %v799, %v1058
    %v1061 = vadd.f32 %v800, %v1059
    %v1062 = vlaneseq
    %v1063 = vand.u32 %v1062, 127
    %v1064 = vld [vmem:[%s0] sm:$0xff]
    %v1065 = vld [vmem:[%s0 + $0x8] sm:$0xff]
    %v1066 = vld [vmem:[%s0 + $0x10] sm:$0xff]
    %v1067 = vld [vmem:[%s0 + $0x18] sm:$0xff]
    %v1068 = vld [vmem:[%s0 + $0x20] sm:$0xff]
    %v1069 = vld [vmem:[%s0 + $0x28] sm:$0xff]
    %1070 = vset.pattern.permute.xlu0 0
    %1071 = vperm.xlu0 %1070, %v1064
    %v1072 = vpop.permute.xlu0 %1071
    %1073 = vset.pattern.permute.xlu0 0
    %1074 = vperm.xlu0 %1073, %v1065
    %v1075 = vpop.permute.xlu0 %1074
    %1076 = vset.pattern.permute.xlu0 0
    %1077 = vperm.xlu0 %1076, %v1066
    %v1078 = vpop.permute.xlu0 %1077
    %1079 = vset.pattern.permute.xlu0 0
    %1080 = vperm.xlu0 %1079, %v1067
    %v1081 = vpop.permute.xlu0 %1080
    %1082 = vset.pattern.permute.xlu0 0
    %1083 = vperm.xlu0 %1082, %v1068
    %v1084 = vpop.permute.xlu0 %1083
    %1085 = vset.pattern.permute.xlu0 0
    %1086 = vperm.xlu0 %1085, %v1069
    %v1087 = vpop.permute.xlu0 %1086
    %vm1088 = vcmp.eq.s32.totalorder %v1063, %v1072
    %vm1089 = vcmp.eq.s32.totalorder %v1063, %v1075
    %vm1090 = vcmp.eq.s32.totalorder %v1063, %v1078
    %vm1091 = vcmp.eq.s32.totalorder %v1063, %v1081
    %vm1092 = vcmp.eq.s32.totalorder %v1063, %v1084
    %vm1093 = vcmp.eq.s32.totalorder %v1063, %v1087
    %v1094 = vsel %vm1088, 1, 0
    %v1095 = vsel %vm1089, 1, 0
    %v1096 = vsel %vm1090, 1, 0
    %v1097 = vsel %vm1091, 1, 0
    %v1098 = vsel %vm1092, 1, 0
    %v1099 = vsel %vm1093, 1, 0
    %v1100 = vcvt.s32.f32 %v1094
    %v1101 = vcvt.s32.f32 %v1095
    %v1102 = vcvt.s32.f32 %v1096
    %v1103 = vcvt.s32.f32 %v1097
    %v1104 = vcvt.s32.f32 %v1098
    %v1105 = vcvt.s32.f32 %v1099
    %v1106 = vpack.c.bf16 %v1101, %v1100
    %v1107 = vpack.c.bf16 %v1103, %v1102
    %v1108 = vpack.c.bf16 %v1105, %v1104
    %v1109 = vld [vmem:[%s1] sm:$0xff]
    %v1110 = vld [vmem:[%s1 + $0x8] sm:$0xff]
    %v1111 = vld [vmem:[%s1 + $0x10] sm:$0xff]
    %v1112 = vld [vmem:[%s1 + $0x18] sm:$0xff]
    %v1113 = vld [vmem:[%s1 + $0x20] sm:$0xff]
    %v1114 = vld [vmem:[%s1 + $0x28] sm:$0xff]
    %1115 = vset.pattern.permute.xlu0 0
    %1116 = vperm.xlu0 %1115, %v1109
    %v1117 = vpop.permute.xlu0 %1116
    %1118 = vset.pattern.permute.xlu0 0
    %1119 = vperm.xlu0 %1118, %v1110
    %v1120 = vpop.permute.xlu0 %1119
    %1121 = vset.pattern.permute.xlu0 0
    %1122 = vperm.xlu0 %1121, %v1111
    %v1123 = vpop.permute.xlu0 %1122
    %1124 = vset.pattern.permute.xlu0 0
    %1125 = vperm.xlu0 %1124, %v1112
    %v1126 = vpop.permute.xlu0 %1125
    %1127 = vset.pattern.permute.xlu0 0
    %1128 = vperm.xlu0 %1127, %v1113
    %v1129 = vpop.permute.xlu0 %1128
    %1130 = vset.pattern.permute.xlu0 0
    %1131 = vperm.xlu0 %1130, %v1114
    %v1132 = vpop.permute.xlu0 %1131
    %vm1133 = vcmp.eq.s32.totalorder %v1063, %v1117
    %vm1134 = vcmp.eq.s32.totalorder %v1063, %v1120
    %vm1135 = vcmp.eq.s32.totalorder %v1063, %v1123
    %vm1136 = vcmp.eq.s32.totalorder %v1063, %v1126
    %vm1137 = vcmp.eq.s32.totalorder %v1063, %v1129
    %vm1138 = vcmp.eq.s32.totalorder %v1063, %v1132
    %v1139 = vsel %vm1133, 1, 0
    %v1140 = vsel %vm1134, 1, 0
    %v1141 = vsel %vm1135, 1, 0
    %v1142 = vsel %vm1136, 1, 0
    %v1143 = vsel %vm1137, 1, 0
    %v1144 = vsel %vm1138, 1, 0
    %v1145 = vcvt.s32.f32 %v1139
    %v1146 = vcvt.s32.f32 %v1140
    %v1147 = vcvt.s32.f32 %v1141
    %v1148 = vcvt.s32.f32 %v1142
    %v1149 = vcvt.s32.f32 %v1143
    %v1150 = vcvt.s32.f32 %v1144
    %v1151 = vpack.c.bf16 %v1146, %v1145
    %v1152 = vpack.c.bf16 %v1148, %v1147
    %v1153 = vpack.c.bf16 %v1150, %v1149
    %v1154 = vpack.c.bf16 %v1061, %v1060
    %v1155 = vld [vmem:[%s17] sm:$0xf]
    %v1156 = vld [vmem:[%s17 + $0x4] sm:$0xf]
    %v1157 = vld [vmem:[%s17 + $0x8] sm:$0xf]
    %v1158 = vld [vmem:[%s17 + $0xc] sm:$0xf]
    %v1163 = vunpack.c.l.b16 %v1155
    %v1164 = vunpack.c.l.b16 %v1156
    %v1165 = vunpack.c.l.b16 %v1157
    %v1166 = vunpack.c.l.b16 %v1158
    %v1167 = vpack.c.b16 %v1164, %v1163
    %v1168 = vpack.c.b16 %v1166, %v1165
    %v1172 = vsel %vm164, %v1154, 0
    %1174 = vmatprep.subr.bf16.mxu0 0
    %1175 = vmatpush1.bf16.msra.mxu0 %v1167
    %1176 = vmatprep.subr.bf16.mxu0 0
    %1177 = vmatpush1.bf16.msra.mxu0 %v1168
    %1178 = vmatprep.subr.bf16.mxu0 0
    %1179 = vmatpush1.bf16.msra.mxu0 0
    %1180 = vmatprep.subr.bf16.mxu0 0
    %1181 = vmatpush1.bf16.msra.mxu0 0
    %1182 = vmatprep.subr.bf16.mxu0 0
    %1183 = vmatpush1.bf16.msra.mxu0 0
    %1184 = vmatprep.subr.bf16.mxu0 0
    %1185 = vmatpush1.bf16.msra.mxu0 0
    %1186 = vmatprep.subr.bf16.mxu0 0
    %1187 = vmatpush1.bf16.msra.mxu0 0
    %1188 = vmatprep.subr.bf16.mxu0 0
    %1189 = vmatpush1.bf16.msra.mxu0 0
    %1190 = vmatprep.subr.bf16.mxu0 0
    %1191 = vmatpush1.bf16.msra.mxu0 0
    %1192 = vmatprep.subr.bf16.mxu0 0
    %1193 = vmatpush1.bf16.msra.mxu0 0
    %1194 = vmatprep.subr.bf16.mxu0 0
    %1195 = vmatpush1.bf16.msra.mxu0 0
    %1196 = vmatprep.subr.bf16.mxu0 0
    %1197 = vmatpush1.bf16.msra.mxu0 0
    %1198 = vmatprep.subr.bf16.mxu0 0
    %1199 = vmatpush1.bf16.msra.mxu0 0
    %1200 = vmatprep.subr.bf16.mxu0 0
    %1201 = vmatpush1.bf16.msra.mxu0 0
    %1202 = vmatprep.subr.bf16.mxu0 0
    %1203 = vmatpush1.bf16.msra.mxu0 0
    %1204 = vmatprep.subr.bf16.mxu0 0
    %1205 = vmatpush1.bf16.msra.mxu0 0
    %1206 = vmatprep.mubr.bf16.mxu0 0
    %1207 = vmatmul.mubr.bf16.gmra.mrb[0].mxu0 %v1172
    %v1208 = vpop.f32.mrb[0].mxu0
    %v1209 = vadd.f32 0.0, %v1208
    %v1210 = vpop.f32.mrb[0].mxu0
    %v1211 = vpop.f32.mrb[0].mxu0
    %v1212 = vadd.f32 0.0, %v1211
    %v1213 = vpop.f32.mrb[0].mxu0
    %1214 = vdwg.mxu0
    %v1215 = vld [vmem:[%s18] sm:$0xf]
    %v1216 = vld [vmem:[%s18 + $0x4] sm:$0xf]
    %v1217 = vld [vmem:[%s18 + $0x8] sm:$0xf]
    %v1218 = vld [vmem:[%s18 + $0xc] sm:$0xf]
    %v1223 = vunpack.c.l.b16 %v1215
    %v1224 = vunpack.c.l.b16 %v1216
    %v1225 = vunpack.c.l.b16 %v1217
    %v1226 = vunpack.c.l.b16 %v1218
    %v1227 = vpack.c.b16 %v1224, %v1223
    %v1228 = vpack.c.b16 %v1226, %v1225
    %1231 = vmatprep.subr.bf16.mxu0 0
    %1232 = vmatpush1.bf16.msra.mxu0 %v1227
    %1233 = vmatprep.subr.bf16.mxu0 0
    %1234 = vmatpush1.bf16.msra.mxu0 %v1228
    %1235 = vmatprep.subr.bf16.mxu0 0
    %1236 = vmatpush1.bf16.msra.mxu0 0
    %1237 = vmatprep.subr.bf16.mxu0 0
    %1238 = vmatpush1.bf16.msra.mxu0 0
    %1239 = vmatprep.subr.bf16.mxu0 0
    %1240 = vmatpush1.bf16.msra.mxu0 0
    %1241 = vmatprep.subr.bf16.mxu0 0
    %1242 = vmatpush1.bf16.msra.mxu0 0
    %1243 = vmatprep.subr.bf16.mxu0 0
    %1244 = vmatpush1.bf16.msra.mxu0 0
    %1245 = vmatprep.subr.bf16.mxu0 0
    %1246 = vmatpush1.bf16.msra.mxu0 0
    %1247 = vmatprep.subr.bf16.mxu0 0
    %1248 = vmatpush1.bf16.msra.mxu0 0
    %1249 = vmatprep.subr.bf16.mxu0 0
    %1250 = vmatpush1.bf16.msra.mxu0 0
    %1251 = vmatprep.subr.bf16.mxu0 0
    %1252 = vmatpush1.bf16.msra.mxu0 0
    %1253 = vmatprep.subr.bf16.mxu0 0
    %1254 = vmatpush1.bf16.msra.mxu0 0
    %1255 = vmatprep.subr.bf16.mxu0 0
    %1256 = vmatpush1.bf16.msra.mxu0 0
    %1257 = vmatprep.subr.bf16.mxu0 0
    %1258 = vmatpush1.bf16.msra.mxu0 0
    %1259 = vmatprep.subr.bf16.mxu0 0
    %1260 = vmatpush1.bf16.msra.mxu0 0
    %1261 = vmatprep.subr.bf16.mxu0 0
    %1262 = vmatpush1.bf16.msra.mxu0 0
    %1263 = vmatprep.mubr.bf16.mxu0 0
    %1264 = vmatmul.mubr.bf16.gmra.mrb[0].mxu0 %v1172
    %v1265 = vpop.f32.mrb[0].mxu0
    %v1266 = vadd.f32 0.0, %v1265
    %v1267 = vpop.f32.mrb[0].mxu0
    %v1268 = vpop.f32.mrb[0].mxu0
    %v1269 = vadd.f32 0.0, %v1268
    %v1270 = vpop.f32.mrb[0].mxu0
    %1271 = vdwg.mxu0
    %v1272 = vpack.c.bf16 %v1212, %v1209
    %v1273 = vpack.c.bf16 %v1269, %v1266
    %v1275 = vsel %vm262, %v1151, 0
    %v1278 = vsel %vm262, %v1152, 0
    %v1281 = vsel %vm262, %v1153, 0
    %1283 = vmatprep.subr.bf16.mxu0 0
    %1284 = vmatpush1.bf16.msra.mxu0 %v1273
    %1285 = vmatprep.subr.bf16.mxu0 0
    %1286 = vmatpush1.bf16.msra.mxu0 0
    %1287 = vmatprep.subr.bf16.mxu0 0
    %1288 = vmatpush1.bf16.msra.mxu0 0
    %1289 = vmatprep.subr.bf16.mxu0 0
    %1290 = vmatpush1.bf16.msra.mxu0 0
    %1291 = vmatprep.subr.bf16.mxu0 0
    %1292 = vmatpush1.bf16.msra.mxu0 0
    %1293 = vmatprep.subr.bf16.mxu0 0
    %1294 = vmatpush1.bf16.msra.mxu0 0
    %1295 = vmatprep.subr.bf16.mxu0 0
    %1296 = vmatpush1.bf16.msra.mxu0 0
    %1297 = vmatprep.subr.bf16.mxu0 0
    %1298 = vmatpush1.bf16.msra.mxu0 0
    %1299 = vmatprep.subr.bf16.mxu0 0
    %1300 = vmatpush1.bf16.msra.mxu0 0
    %1301 = vmatprep.subr.bf16.mxu0 0
    %1302 = vmatpush1.bf16.msra.mxu0 0
    %1303 = vmatprep.subr.bf16.mxu0 0
    %1304 = vmatpush1.bf16.msra.mxu0 0
    %1305 = vmatprep.subr.bf16.mxu0 0
    %1306 = vmatpush1.bf16.msra.mxu0 0
    %1307 = vmatprep.subr.bf16.mxu0 0
    %1308 = vmatpush1.bf16.msra.mxu0 0
    %1309 = vmatprep.subr.bf16.mxu0 0
    %1310 = vmatpush1.bf16.msra.mxu0 0
    %1311 = vmatprep.subr.bf16.mxu0 0
    %1312 = vmatpush1.bf16.msra.mxu0 0
    %1313 = vmatprep.subr.bf16.mxu0 0
    %1314 = vmatpush1.bf16.msra.mxu0 0
    %1315 = vmatprep.mubr.bf16.mxu0 0
    %1316 = vmatmul.mubr.bf16.gmra.mrb[0].mxu0 %v1275
    %v1317 = vpop.f32.mrb[0].mxu0
    %v1318 = vadd.f32 0.0, %v1317
    %v1319 = vpop.f32.mrb[0].mxu0
    %v1320 = vpop.f32.mrb[0].mxu0
    %v1321 = vadd.f32 0.0, %v1320
    %v1322 = vpop.f32.mrb[0].mxu0
    %1323 = vmatprep.mubr.bf16.mxu0 0
    %1324 = vmatmul.mubr.bf16.gmra.mrb[0].mxu0 %v1278
    %v1325 = vpop.f32.mrb[0].mxu0
    %v1326 = vadd.f32 0.0, %v1325
    %v1327 = vpop.f32.mrb[0].mxu0
    %v1328 = vpop.f32.mrb[0].mxu0
    %v1329 = vadd.f32 0.0, %v1328
    %v1330 = vpop.f32.mrb[0].mxu0
    %1331 = vmatprep.mubr.bf16.mxu0 0
    %1332 = vmatmul.mubr.bf16.gmra.mrb[0].mxu0 %v1281
    %v1333 = vpop.f32.mrb[0].mxu0
    %v1334 = vadd.f32 0.0, %v1333
    %v1335 = vpop.f32.mrb[0].mxu0
    %v1336 = vpop.f32.mrb[0].mxu0
    %v1337 = vadd.f32 0.0, %v1336
    %v1338 = vpop.f32.mrb[0].mxu0
    %1339 = vdwg.mxu0
    %v1341 = vsel %vm262, %v1106, 0
    %v1344 = vsel %vm262, %v1107, 0
    %v1347 = vsel %vm262, %v1108, 0
    %1349 = vmatprep.subr.bf16.mxu0 0
    %1350 = vmatpush1.bf16.msra.mxu0 %v1272
    %1351 = vmatprep.subr.bf16.mxu0 0
    %1352 = vmatpush1.bf16.msra.mxu0 0
    %1353 = vmatprep.subr.bf16.mxu0 0
    %1354 = vmatpush1.bf16.msra.mxu0 0
    %1355 = vmatprep.subr.bf16.mxu0 0
    %1356 = vmatpush1.bf16.msra.mxu0 0
    %1357 = vmatprep.subr.bf16.mxu0 0
    %1358 = vmatpush1.bf16.msra.mxu0 0
    %1359 = vmatprep.subr.bf16.mxu0 0
    %1360 = vmatpush1.bf16.msra.mxu0 0
    %1361 = vmatprep.subr.bf16.mxu0 0
    %1362 = vmatpush1.bf16.msra.mxu0 0
    %1363 = vmatprep.subr.bf16.mxu0 0
    %1364 = vmatpush1.bf16.msra.mxu0 0
    %1365 = vmatprep.subr.bf16.mxu0 0
    %1366 = vmatpush1.bf16.msra.mxu0 0
    %1367 = vmatprep.subr.bf16.mxu0 0
    %1368 = vmatpush1.bf16.msra.mxu0 0
    %1369 = vmatprep.subr.bf16.mxu0 0
    %1370 = vmatpush1.bf16.msra.mxu0 0
    %1371 = vmatprep.subr.bf16.mxu0 0
    %1372 = vmatpush1.bf16.msra.mxu0 0
    %1373 = vmatprep.subr.bf16.mxu0 0
    %1374 = vmatpush1.bf16.msra.mxu0 0
    %1375 = vmatprep.subr.bf16.mxu0 0
    %1376 = vmatpush1.bf16.msra.mxu0 0
    %1377 = vmatprep.subr.bf16.mxu0 0
    %1378 = vmatpush1.bf16.msra.mxu0 0
    %1379 = vmatprep.subr.bf16.mxu0 0
    %1380 = vmatpush1.bf16.msra.mxu0 0
    %1381 = vmatprep.mubr.bf16.mxu0 0
    %1382 = vmatmul.mubr.bf16.gmra.mrb[0].mxu0 %v1341
    %v1383 = vpop.f32.mrb[0].mxu0
    %v1384 = vadd.f32 %v1318, %v1383
    %v1385 = vpop.f32.mrb[0].mxu0
    %v1386 = vpop.f32.mrb[0].mxu0
    %v1387 = vadd.f32 %v1321, %v1386
    %v1388 = vpop.f32.mrb[0].mxu0
    %1389 = vmatprep.mubr.bf16.mxu0 0
    %1390 = vmatmul.mubr.bf16.gmra.mrb[0].mxu0 %v1344
    %v1391 = vpop.f32.mrb[0].mxu0
    %v1392 = vadd.f32 %v1326, %v1391
    %v1393 = vpop.f32.mrb[0].mxu0
    %v1394 = vpop.f32.mrb[0].mxu0
    %v1395 = vadd.f32 %v1329, %v1394
    %v1396 = vpop.f32.mrb[0].mxu0
    %1397 = vmatprep.mubr.bf16.mxu0 0
    %1398 = vmatmul.mubr.bf16.gmra.mrb[0].mxu0 %v1347
    %v1399 = vpop.f32.mrb[0].mxu0
    %v1400 = vadd.f32 %v1334, %v1399
    %v1401 = vpop.f32.mrb[0].mxu0
    %v1402 = vpop.f32.mrb[0].mxu0
    %v1403 = vadd.f32 %v1337, %v1402
    %v1404 = vpop.f32.mrb[0].mxu0
    %1405 = vdwg.mxu0
    %v1406 = vld [vmem:[%s19] sm:$0x1]
    %v1408 = vlaneseq
    %v1409 = vshrl.u32 %v1408, 7
    %v1410 = vsub.s32 0, %v1409
    %v1411 = vrot.slane %v1406, %v1410
    %v1413 = vadd.f32 %v1384, %v1411
    %v1414 = vadd.f32 %v1387, %v1411
    %v1415 = vadd.f32 %v1392, %v1411
    %v1416 = vadd.f32 %v1395, %v1411
    %v1417 = vadd.f32 %v1400, %v1411
    %v1418 = vadd.f32 %v1403, %v1411
    %v1419 = vmax.f32 %v1413, 0.0
    %v1420 = vmax.f32 %v1414, 0.0
    %v1421 = vmax.f32 %v1415, 0.0
    %v1422 = vmax.f32 %v1416, 0.0
    %v1423 = vmax.f32 %v1417, 0.0
    %v1424 = vmax.f32 %v1418, 0.0
    %v1425 = vpack.c.bf16 %v1420, %v1419
    %v1426 = vpack.c.bf16 %v1422, %v1421
    %v1427 = vpack.c.bf16 %v1424, %v1423
    %v1428 = vld [vmem:[%s20] sm:$0xf]
    %v1429 = vld [vmem:[%s20 + $0x4] sm:$0xf]
    %v1430 = vld [vmem:[%s20 + $0x8] sm:$0xf]
    %v1431 = vld [vmem:[%s20 + $0xc] sm:$0xf]
    %v1432 = vld [vmem:[%s21] sm:$0x1]
    %v1434 = vlaneseq
    %v1435 = vshrl.u32 %v1434, 7
    %v1436 = vsub.s32 0, %v1435
    %v1437 = vrot.slane %v1432, %v1436
    %v1443 = vunpack.c.l.b16 %v1428
    %v1444 = vunpack.c.l.b16 %v1429
    %v1445 = vunpack.c.l.b16 %v1430
    %v1446 = vunpack.c.l.b16 %v1431
    %v1447 = vpack.c.b16 %v1444, %v1443
    %v1448 = vpack.c.b16 %v1446, %v1445
    %v1452 = vsel %vm164, %v1425, 0
    %v1455 = vsel %vm164, %v1426, 0
    %v1458 = vsel %vm164, %v1427, 0
    %1460 = vmatprep.subr.bf16.mxu0 0
    %1461 = vmatpush1.bf16.msra.mxu0 %v1447
    %1462 = vmatprep.subr.bf16.mxu0 0
    %1463 = vmatpush1.bf16.msra.mxu0 %v1448
    %1464 = vmatprep.subr.bf16.mxu0 0
    %1465 = vmatpush1.bf16.msra.mxu0 0
    %1466 = vmatprep.subr.bf16.mxu0 0
    %1467 = vmatpush1.bf16.msra.mxu0 0
    %1468 = vmatprep.subr.bf16.mxu0 0
    %1469 = vmatpush1.bf16.msra.mxu0 0
    %1470 = vmatprep.subr.bf16.mxu0 0
    %1471 = vmatpush1.bf16.msra.mxu0 0
    %1472 = vmatprep.subr.bf16.mxu0 0
    %1473 = vmatpush1.bf16.msra.mxu0 0
    %1474 = vmatprep.subr.bf16.mxu0 0
    %1475 = vmatpush1.bf16.msra.mxu0 0
    %1476 = vmatprep.subr.bf16.mxu0 0
    %1477 = vmatpush1.bf16.msra.mxu0 0
    %1478 = vmatprep.subr.bf16.mxu0 0
    %1479 = vmatpush1.bf16.msra.mxu0 0
    %1480 = vmatprep.subr.bf16.mxu0 0
    %1481 = vmatpush1.bf16.msra.mxu0 0
    %1482 = vmatprep.subr.bf16.mxu0 0
    %1483 = vmatpush1.bf16.msra.mxu0 0
    %1484 = vmatprep.subr.bf16.mxu0 0
    %1485 = vmatpush1.bf16.msra.mxu0 0
    %1486 = vmatprep.subr.bf16.mxu0 0
    %1487 = vmatpush1.bf16.msra.mxu0 0
    %1488 = vmatprep.subr.bf16.mxu0 0
    %1489 = vmatpush1.bf16.msra.mxu0 0
    %1490 = vmatprep.subr.bf16.mxu0 0
    %1491 = vmatpush1.bf16.msra.mxu0 0
    %1492 = vmatprep.mubr.bf16.mxu0 0
    %1493 = vmatmul.mubr.bf16.gmra.mrb[0].mxu0 %v1452
    %v1494 = vpop.f32.mrb[0].mxu0
    %v1495 = vadd.f32 %v1437, %v1494
    %v1496 = vpop.f32.mrb[0].mxu0
    %v1497 = vpop.f32.mrb[0].mxu0
    %v1498 = vadd.f32 %v1437, %v1497
    %v1499 = vpop.f32.mrb[0].mxu0
    %1500 = vmatprep.mubr.bf16.mxu0 0
    %1501 = vmatmul.mubr.bf16.gmra.mrb[0].mxu0 %v1455
    %v1502 = vpop.f32.mrb[0].mxu0
    %v1503 = vadd.f32 %v1437, %v1502
    %v1504 = vpop.f32.mrb[0].mxu0
    %v1505 = vpop.f32.mrb[0].mxu0
    %v1506 = vadd.f32 %v1437, %v1505
    %v1507 = vpop.f32.mrb[0].mxu0
    %1508 = vmatprep.mubr.bf16.mxu0 0
    %1509 = vmatmul.mubr.bf16.gmra.mrb[0].mxu0 %v1458
    %v1510 = vpop.f32.mrb[0].mxu0
    %v1511 = vadd.f32 %v1437, %v1510
    %v1512 = vpop.f32.mrb[0].mxu0
    %v1513 = vpop.f32.mrb[0].mxu0
    %v1514 = vadd.f32 %v1437, %v1513
    %v1515 = vpop.f32.mrb[0].mxu0
    %1516 = vdwg.mxu0
    %v1517 = vmax.f32 %v1495, 0.0
    %v1518 = vmax.f32 %v1498, 0.0
    %v1519 = vmax.f32 %v1503, 0.0
    %v1520 = vmax.f32 %v1506, 0.0
    %v1521 = vmax.f32 %v1511, 0.0
    %v1522 = vmax.f32 %v1514, 0.0
    %v1523 = vpack.c.bf16 %v1518, %v1517
    %v1524 = vpack.c.bf16 %v1520, %v1519
    %v1525 = vpack.c.bf16 %v1522, %v1521
    %v1526 = vld [vmem:[%s22] sm:$0xf]
    %v1527 = vld [vmem:[%s22 + $0x4] sm:$0xf]
    %v1528 = vld [vmem:[%s23] sm:$0x1]
    %v1530 = vlaneseq
    %v1531 = vshrl.u32 %v1530, 7
    %v1532 = vsub.s32 0, %v1531
    %v1533 = vrot.slane %v1528, %v1532
    %v1537 = vunpack.c.l.b16 %v1526
    %v1538 = vunpack.c.l.b16 %v1527
    %v1539 = vpack.c.b16 %v1538, %v1537
    %v1542 = vsel %vm262, %v1523, 0
    %v1545 = vsel %vm262, %v1524, 0
    %v1548 = vsel %vm262, %v1525, 0
    %1550 = vmatprep.subr.bf16.mxu0 0
    %1551 = vmatpush1.bf16.msra.mxu0 %v1539
    %1552 = vmatprep.subr.bf16.mxu0 0
    %1553 = vmatpush1.bf16.msra.mxu0 0
    %1554 = vmatprep.subr.bf16.mxu0 0
    %1555 = vmatpush1.bf16.msra.mxu0 0
    %1556 = vmatprep.subr.bf16.mxu0 0
    %1557 = vmatpush1.bf16.msra.mxu0 0
    %1558 = vmatprep.subr.bf16.mxu0 0
    %1559 = vmatpush1.bf16.msra.mxu0 0
    %1560 = vmatprep.subr.bf16.mxu0 0
    %1561 = vmatpush1.bf16.msra.mxu0 0
    %1562 = vmatprep.subr.bf16.mxu0 0
    %1563 = vmatpush1.bf16.msra.mxu0 0
    %1564 = vmatprep.subr.bf16.mxu0 0
    %1565 = vmatpush1.bf16.msra.mxu0 0
    %1566 = vmatprep.subr.bf16.mxu0 0
    %1567 = vmatpush1.bf16.msra.mxu0 0
    %1568 = vmatprep.subr.bf16.mxu0 0
    %1569 = vmatpush1.bf16.msra.mxu0 0
    %1570 = vmatprep.subr.bf16.mxu0 0
    %1571 = vmatpush1.bf16.msra.mxu0 0
    %1572 = vmatprep.subr.bf16.mxu0 0
    %1573 = vmatpush1.bf16.msra.mxu0 0
    %1574 = vmatprep.subr.bf16.mxu0 0
    %1575 = vmatpush1.bf16.msra.mxu0 0
    %1576 = vmatprep.subr.bf16.mxu0 0
    %1577 = vmatpush1.bf16.msra.mxu0 0
    %1578 = vmatprep.subr.bf16.mxu0 0
    %1579 = vmatpush1.bf16.msra.mxu0 0
    %1580 = vmatprep.subr.bf16.mxu0 0
    %1581 = vmatpush1.bf16.msra.mxu0 0
    %1582 = vmatprep.mubr.bf16.mxu0 0
    %1583 = vmatmul.mubr.bf16.gmra.mrb[0].mxu0 %v1542
    %v1584 = vpop.f32.mrb[0].mxu0
    %v1585 = vadd.f32 %v1533, %v1584
    %v1586 = vpop.f32.mrb[0].mxu0
    %v1587 = vpop.f32.mrb[0].mxu0
    %v1588 = vadd.f32 %v1533, %v1587
    %v1589 = vpop.f32.mrb[0].mxu0
    %1590 = vmatprep.mubr.bf16.mxu0 0
    %1591 = vmatmul.mubr.bf16.gmra.mrb[0].mxu0 %v1545
    %v1592 = vpop.f32.mrb[0].mxu0
    %v1593 = vadd.f32 %v1533, %v1592
    %v1594 = vpop.f32.mrb[0].mxu0
    %v1595 = vpop.f32.mrb[0].mxu0
    %v1596 = vadd.f32 %v1533, %v1595
    %v1597 = vpop.f32.mrb[0].mxu0
    %1598 = vmatprep.mubr.bf16.mxu0 0
    %1599 = vmatmul.mubr.bf16.gmra.mrb[0].mxu0 %v1548
    %v1600 = vpop.f32.mrb[0].mxu0
    %v1601 = vadd.f32 %v1533, %v1600
    %v1602 = vpop.f32.mrb[0].mxu0
    %v1603 = vpop.f32.mrb[0].mxu0
    %v1604 = vadd.f32 %v1533, %v1603
    %v1605 = vpop.f32.mrb[0].mxu0
    %1606 = vdwg.mxu0
    %1607 = vst [vmem:[#allocation3] sm:$0xff] %v1585
    %1608 = vst [vmem:[#allocation3 + $0x8] sm:$0xff] %v1588
    %1609 = vst [vmem:[#allocation3 + $0x10] sm:$0xff] %v1593
    %1610 = vst [vmem:[#allocation3 + $0x18] sm:$0xff] %v1596
    %1611 = vst [vmem:[#allocation3 + $0x20] sm:$0xff] %v1601
    %1612 = vst [vmem:[#allocation3 + $0x28] sm:$0xff] %v1604
    // Predicated region
    $region98: #{tpu_custom_call.1} parent=1 // pred_check
      _
    $region99: #{tpu_custom_call.1} parent=1 // pred_check_branch
      %1614 = sbr.rel (0) target = $region101
    $region100: #{tpu_custom_call.1} parent=1 // pred_region
      %s1616 = ssub.s32 768, 768
      %1617 = vsyncadd [#allocation4], %s1616
      %s1618 = sshll.u32 [#allocation3], 4
      %s1619 = int_to_ptr.vmem [resolvable:$true] %s1618
      %1624 = dma.vmem_to_hbm [thread:$0]  %s1619, 768, %s24, [#allocation4], 128, 128, 8
    $region101: #{tpu_custom_call.1} parent=1 // pred_fallthru
      _
    // Predicated region
    $region102: #{tpu_custom_call.1} parent=1 // pred_check
      _
    $region103: #{tpu_custom_call.1} parent=1 // pred_check_branch
      %1626 = sbr.rel (0) target = $region105
    $region104: #{tpu_custom_call.1} parent=1 // pred_region
      %1627 = dma.done [#allocation4], 768
    $region105: #{tpu_custom_call.1} parent=1 // pred_fallthru
      _
    %1628 = vsyncpa [#allocation4], 1

</llo_original>
